<compile_context>
chip_gen: v7x
topology: tpu7x:2x2x1
jax: 0.10.0
libtpu: 0.0.40
codegen_flags: <defaults>
</compile_context>

<pallas_src>
import functools
import math

import jax
import jax.numpy as jnp
from jax import lax
from jax.experimental import pallas as pl
from jax.experimental.pallas import tpu as pltpu


def _layer_norm(z, gamma, beta, eps=1e-5):
    mu = jnp.mean(z, axis=-1, keepdims=True)
    var = jnp.mean((z - mu) ** 2, axis=-1, keepdims=True)
    return (z - mu) * lax.rsqrt(var + eps) * gamma + beta


def transformer_block_kernel(len_ref,                   # scalar-prefetch (B,) int32 in SMEM
                             x_ref,                     # (1, N, C) f32
                             wq_ref, wk_ref, wv_ref,    # (H, C, D) bf16 each (head-major)
                             wo_ref,                    # (H, D, C) bf16
                             ln_g_ref, ln_b_ref,        # (1, C) f32 (shared LayerNorm)
                             w1_ref, b1_ref, w2_ref, b2_ref,
                             out_ref,                   # (1, N, C) f32
                             *, num_heads, head_dim):
    f32 = jnp.float32
    bf16 = jnp.bfloat16
    H, D = num_heads, head_dim

    b = pl.program_id(0)
    x = x_ref[0]                                        # (N, C) f32
    N, C = x.shape

    # ---- key-padding mask from the prefetched valid length (built once, added once) ----
    valid = len_ref[b]
    col = lax.broadcasted_iota(jnp.int32, (1, 1, N), 2)
    add_mask = jnp.where(col < valid, f32(0.0), f32(-1e30))      # (1, 1, N) f32

    # ---- head-major Q/K/V: x broadcast ONCE over H, three batched dot_generals ----
    # (H, N, D) layout keeps heads off the 128-lane axis; no slices, no transposes.
    xh = jnp.broadcast_to(x.astype(bf16), (H, N, C))              # hoisted, reused 3x
    q = jnp.einsum('hnc,hcd->hnd', xh, wq_ref[...], preferred_element_type=f32)
    k = jnp.einsum('hnc,hcd->hnd', xh, wk_ref[...], preferred_element_type=f32)
    v = jnp.einsum('hnc,hcd->hnd', xh, wv_ref[...], preferred_element_type=f32)
    q = (q * (1.0 / math.sqrt(D))).astype(bf16)                   # scale folded into q once
    k = k.astype(bf16)
    v = v.astype(bf16)

    # ---- head-batched attention (single MXU-batched dot per stage) ----
    s = jnp.einsum('hqd,hkd->hqk', q, k, preferred_element_type=f32)     # (H, N, N) f32
    s = s + add_mask
    s = s - jnp.max(s, axis=-1, keepdims=True)
    p = jnp.exp(s)                                                        # f32 (v5e-safe)
    p = p * pl.reciprocal(jnp.sum(p, axis=-1, keepdims=True), approx=True)
    ctx = jnp.einsum('hqk,hkd->hqd', p.astype(bf16), v,
                     preferred_element_type=f32)                          # (H, N, D) f32

    # ---- head-batched output projection, reduced over H with VPU adds (no concat) ----
    attn_h = jnp.einsum('hnd,hdc->hnc', ctx.astype(bf16), wo_ref[...],
                        preferred_element_type=f32)                       # (H, N, C) f32
    attn = jnp.sum(attn_h, axis=0)                                        # (N, C) f32

    gamma = ln_g_ref[...]
    beta = ln_b_ref[...]

    # ---- residual + LayerNorm (f32) ----
    x1 = _layer_norm(x + attn, gamma, beta)

    # ---- MLP: Linear -> ReLU -> Linear (bf16 MXU inputs, f32 math) ----
    h1 = jnp.dot(x1.astype(bf16), w1_ref[...], preferred_element_type=f32) + b1_ref[...]
    h1 = jnp.maximum(h1, 0.0)
    o2 = jnp.dot(h1.astype(bf16), w2_ref[...], preferred_element_type=f32) + b2_ref[...]

    # ---- residual + (shared-weight) LayerNorm ----
    x2 = _layer_norm(x1 + o2, gamma, beta)
    out_ref[0] = x2.astype(out_ref.dtype)


def transformer_block(x, lengths, params):
    """x: [B, N, C] f32; lengths: [B] int32 valid token counts (key-padding mask)."""
    B, N, C = x.shape
    wq, wk, wv, wo = params["wq"], params["wk"], params["wv"], params["wo"]
    H, _, D = wq.shape
    HD = H * D
    M = params["w1"].shape[1]
    f32, bf16 = jnp.float32, jnp.bfloat16

    # ---- layout plumbing (plain JAX, outside the kernel) ----
    # Per-head weights are already head-major (H, C, D) / (H, D, C): just cast.
    wq_b, wk_b, wv_b, wo_b = (w.astype(bf16) for w in (wq, wk, wv, wo))
    w1 = params["w1"].astype(bf16)
    w2 = params["w2"].astype(bf16)
    b1 = params["b1"].reshape(1, M).astype(f32)
    b2 = params["b2"].reshape(1, C).astype(f32)
    ln_g = params["ln_g"].reshape(1, C).astype(f32)
    ln_b = params["ln_b"].reshape(1, C).astype(f32)

    kernel = functools.partial(transformer_block_kernel, num_heads=H, head_dim=D)
    full = lambda shape: pl.BlockSpec(shape, lambda b, lens: (0,) * len(shape))

    # Advisory cost estimate (lets XLA schedule the wrapper-side casts around us).
    flops = 2 * B * N * (3 * C * HD + 2 * N * HD + HD * C + 2 * C * M)
    transcendentals = B * H * N * N
    bytes_accessed = (2 * B * N * C * 4                                   # x in + out
                      + (3 * H * C * D + H * D * C + C * M + M * C) * 2   # bf16 weights
                      + (2 * C + M + C) * 4 + B * 4)                      # f32 vectors, lengths

    return pl.pallas_call(
        kernel,
        out_shape=jax.ShapeDtypeStruct((B, N, C), f32),
        grid_spec=pltpu.PrefetchScalarGridSpec(
            num_scalar_prefetch=1,                      # lengths -> SMEM, no [B,N,N] mask DMA
            grid=(B,),
            in_specs=[
                pl.BlockSpec((1, N, C), lambda b, lens: (b, 0, 0)),   # x
                full((H, C, D)),                                      # w_q (head-major)
                full((H, C, D)),                                      # w_k
                full((H, C, D)),                                      # w_v
                full((H, D, C)),                                      # w_o (head-major)
                full((1, C)),                                         # ln gamma
                full((1, C)),                                         # ln beta
                full((C, M)),                                         # mlp W1
                full((1, M)),                                         # mlp b1
                full((M, C)),                                         # mlp W2
                full((1, C)),                                         # mlp b2
            ],
            out_specs=pl.BlockSpec((1, N, C), lambda b, lens: (b, 0, 0)),
        ),
        compiler_params=pltpu.CompilerParams(
            dimension_semantics=("parallel",),          # B>=2 -> both v7x TCs busy
            vmem_limit_bytes=64 * 1024 * 1024),         # v5e scoped default is only 16 MiB
        cost_estimate=pl.CostEstimate(
            flops=flops, transcendentals=transcendentals,
            bytes_accessed=bytes_accessed),
    )(lengths, x, wq_b, wk_b, wv_b, wo_b, ln_g, ln_b, w1, b1, w2, b2)


# ---------------- pure-JAX reference (same math, per-head einsum form) ----------------
def reference_block(x, mask, params):
    f32, bf16 = jnp.float32, jnp.bfloat16
    bf = lambda a: a.astype(bf16)
    wq, wk, wv, wo = params["wq"], params["wk"], params["wv"], params["wo"]
    ln_g, ln_b = params["ln_g"], params["ln_b"]
    w1, b1, w2, b2 = params["w1"], params["b1"], params["w2"], params["b2"]
    D = wq.shape[-1]

    q = jnp.einsum("blj,njd->bnld", bf(x), bf(wq), preferred_element_type=f32)
    q = q / jnp.sqrt(f32(D))
    k = jnp.einsum("blj,njd->bnld", bf(x), bf(wk), preferred_element_type=f32)
    v = jnp.einsum("blj,njd->bnld", bf(x), bf(wv), preferred_element_type=f32)
    a = jnp.einsum("bnld,bnmd->bnlm", bf(q), bf(k), preferred_element_type=f32)
    a = jnp.where(mask[:, None, :, :] > 0, a, -1e30)
    a = jax.nn.softmax(a, axis=-1)
    o = jnp.einsum("bnlm,bnmd->bnld", bf(a), bf(v), preferred_element_type=f32)
    attn = jnp.einsum("bnld,ndj->blj", bf(o), bf(wo), preferred_element_type=f32)

    def ln(z):
        mu = jnp.mean(z, axis=-1, keepdims=True)
        var = jnp.mean((z - mu) ** 2, axis=-1, keepdims=True)
        return (z - mu) * jax.lax.rsqrt(var + 1e-5) * ln_g + ln_b

    x1 = ln(x + attn)
    h1 = jnp.maximum(jnp.dot(bf(x1), bf(w1), preferred_element_type=f32) + b1, 0.0)
    o2 = jnp.dot(bf(h1), bf(w2), preferred_element_type=f32) + b2
    return ln(x1 + o2)


if __name__ == "__main__":
    B, N, C = 2, 8, 32      # batch, seq length, embed_dim
    H, D = 2, 16            # num_heads, per-head latent dim
    M = 64                  # MLP hidden dim (mlp_spec = [C, M, C])

    key = jax.random.PRNGKey(0)
    ks = jax.random.split(key, 10)

    x = jax.random.normal(ks[0], (B, N, C), dtype=jnp.float32)
    lengths = jnp.array([N, 5], dtype=jnp.int32)        # valid tokens per batch element

    s = 0.1
    params = {
        "wq": s * jax.random.normal(ks[1], (H, C, D), jnp.float32),
        "wk": s * jax.random.normal(ks[2], (H, C, D), jnp.float32),
        "wv": s * jax.random.normal(ks[3], (H, C, D), jnp.float32),
        "wo": s * jax.random.normal(ks[4], (H, D, C), jnp.float32),
        "ln_g": jnp.ones((C,), jnp.float32),            # nn.LayerNorm default init
        "ln_b": jnp.zeros((C,), jnp.float32),
        "w1": s * jax.random.normal(ks[5], (C, M), jnp.float32),
        "b1": s * jax.random.normal(ks[6], (M,), jnp.float32),
        "w2": s * jax.random.normal(ks[7], (M, C), jnp.float32),
        "b2": s * jax.random.normal(ks[8], (C,), jnp.float32),
    }

    out = transformer_block(x, lengths, params)
    out = jax.block_until_ready(out)

    # reference uses the module's original [B, N, N] mask built from the same lengths
    col = jnp.arange(N)[None, None, :]
    mask = (col < lengths[:, None, None]).astype(jnp.float32) * jnp.ones((B, N, N), jnp.float32)
    ref = reference_block(x, mask, params)

    assert out.shape == (B, N, C)
    assert jnp.allclose(out, ref, atol=1e-2, rtol=1e-2), "mismatch vs reference"

    print("KERNEL_OK")
</pallas_src>

<mosaic_0001>
module attributes {stable_mosaic.version = 11 : i64} {
  func.func @transformer_block_kernel(%arg0: i32, %arg1: memref<2xi32, #tpu.memory_space<smem>>, %arg2: memref<1x8x32xf32, #tpu.memory_space<vmem>>, %arg3: memref<2x32x16xbf16, #tpu.memory_space<vmem>>, %arg4: memref<2x32x16xbf16, #tpu.memory_space<vmem>>, %arg5: memref<2x32x16xbf16, #tpu.memory_space<vmem>>, %arg6: memref<2x16x32xbf16, #tpu.memory_space<vmem>>, %arg7: memref<1x32xf32, #tpu.memory_space<vmem>>, %arg8: memref<1x32xf32, #tpu.memory_space<vmem>>, %arg9: memref<32x64xbf16, #tpu.memory_space<vmem>>, %arg10: memref<1x64xf32, #tpu.memory_space<vmem>>, %arg11: memref<64x32xbf16, #tpu.memory_space<vmem>>, %arg12: memref<1x32xf32, #tpu.memory_space<vmem>>, %arg13: memref<1x8x32xf32, #tpu.memory_space<vmem>>) attributes {dimension_semantics = [#tpu.dimension_semantics<parallel>], iteration_bounds = array<i64: 2>, scalar_prefetch = 1 : i64, scratch_operands = 0 : i64, tpu.core_type = #tpu.core_type<tc>, window_params = [{transform_indices = @transform_0, window_bounds = array<i64: 1, 8, 32>}, {pipeline_mode = #tpu.pipeline_mode<synchronous>, transform_indices = @transform_1, window_bounds = array<i64: 2, 32, 16>}, {pipeline_mode = #tpu.pipeline_mode<synchronous>, transform_indices = @transform_2, window_bounds = array<i64: 2, 32, 16>}, {pipeline_mode = #tpu.pipeline_mode<synchronous>, transform_indices = @transform_3, window_bounds = array<i64: 2, 32, 16>}, {pipeline_mode = #tpu.pipeline_mode<synchronous>, transform_indices = @transform_4, window_bounds = array<i64: 2, 16, 32>}, {pipeline_mode = #tpu.pipeline_mode<synchronous>, transform_indices = @transform_5, window_bounds = array<i64: 1, 32>}, {pipeline_mode = #tpu.pipeline_mode<synchronous>, transform_indices = @transform_6, window_bounds = array<i64: 1, 32>}, {pipeline_mode = #tpu.pipeline_mode<synchronous>, transform_indices = @transform_7, window_bounds = array<i64: 32, 64>}, {pipeline_mode = #tpu.pipeline_mode<synchronous>, transform_indices = @transform_8, window_bounds = array<i64: 1, 64>}, {pipeline_mode = #tpu.pipeline_mode<synchronous>, transform_indices = @transform_9, window_bounds = array<i64: 64, 32>}, {pipeline_mode = #tpu.pipeline_mode<synchronous>, transform_indices = @transform_10, window_bounds = array<i64: 1, 32>}, {transform_indices = @transform_11, window_bounds = array<i64: 1, 8, 32>}]} {
    %c0 = arith.constant 0 : index
    %c0_0 = arith.constant 0 : index
    %c0_1 = arith.constant 0 : index
    %0 = vector.load %arg2[%c0, %c0_0, %c0_1] : memref<1x8x32xf32, #tpu.memory_space<vmem>>, vector<1x8x32xf32>
    %1 = vector.shape_cast %0 : vector<1x8x32xf32> to vector<8x32xf32>
    %2 = arith.index_cast %arg0 : i32 to index
    %3 = memref.load %arg1[%2] : memref<2xi32, #tpu.memory_space<smem>>
    %4 = tpu.iota {dimensions = array<i32: 2>} : vector<1x1x8xi32>
    %5 = vector.broadcast %3 : i32 to vector<1x1x8xi32>
    %6 = arith.cmpi slt, %4, %5 : vector<1x1x8xi32>
    %cst = arith.constant 0.000000e+00 : f32
    %cst_2 = arith.constant -1.000000e+30 : f32
    %7 = vector.broadcast %cst : f32 to vector<1x1x8xf32>
    %8 = vector.broadcast %cst_2 : f32 to vector<1x1x8xf32>
    %9 = arith.select %6, %7, %8 : vector<1x1x8xi1>, vector<1x1x8xf32>
    %10 = arith.truncf %1 : vector<8x32xf32> to vector<8x32xbf16>
    %11 = vector.shape_cast %10 : vector<8x32xbf16> to vector<1x8x32xbf16>
    %12 = vector.broadcast %11 : vector<1x8x32xbf16> to vector<2x8x32xbf16>
    %c0_3 = arith.constant 0 : index
    %c0_4 = arith.constant 0 : index
    %c0_5 = arith.constant 0 : index
    %13 = vector.load %arg3[%c0_3, %c0_4, %c0_5] : memref<2x32x16xbf16, #tpu.memory_space<vmem>>, vector<2x32x16xbf16>
    "tpu.trace_start"() <{level = 10 : i32, message = "hnc,hcd->hnd"}> : () -> ()
    %cst_6 = arith.constant dense<0.000000e+00> : vector<2x8x16xf32>
    %14 = tpu.matmul %12, %13, %cst_6 {dimension_numbers = #tpu.dot_dimension_numbers<[2], [1], [1], [2], [0, 0, 0, 1, 1, 2], [0], [0]>} : vector<2x8x32xbf16>, vector<2x32x16xbf16>, vector<2x8x16xf32> -> vector<2x8x16xf32>
    "tpu.trace_stop"() : () -> ()
    %c0_7 = arith.constant 0 : index
    %c0_8 = arith.constant 0 : index
    %c0_9 = arith.constant 0 : index
    %15 = vector.load %arg4[%c0_7, %c0_8, %c0_9] : memref<2x32x16xbf16, #tpu.memory_space<vmem>>, vector<2x32x16xbf16>
    "tpu.trace_start"() <{level = 10 : i32, message = "hnc,hcd->hnd"}> : () -> ()
    %cst_10 = arith.constant dense<0.000000e+00> : vector<2x8x16xf32>
    %16 = tpu.matmul %12, %15, %cst_10 {dimension_numbers = #tpu.dot_dimension_numbers<[2], [1], [1], [2], [0, 0, 0, 1, 1, 2], [0], [0]>} : vector<2x8x32xbf16>, vector<2x32x16xbf16>, vector<2x8x16xf32> -> vector<2x8x16xf32>
    "tpu.trace_stop"() : () -> ()
    %c0_11 = arith.constant 0 : index
    %c0_12 = arith.constant 0 : index
    %c0_13 = arith.constant 0 : index
    %17 = vector.load %arg5[%c0_11, %c0_12, %c0_13] : memref<2x32x16xbf16, #tpu.memory_space<vmem>>, vector<2x32x16xbf16>
    "tpu.trace_start"() <{level = 10 : i32, message = "hnc,hcd->hnd"}> : () -> ()
    %cst_14 = arith.constant dense<0.000000e+00> : vector<2x8x16xf32>
    %18 = tpu.matmul %12, %17, %cst_14 {dimension_numbers = #tpu.dot_dimension_numbers<[2], [1], [1], [2], [0, 0, 0, 1, 1, 2], [0], [0]>} : vector<2x8x32xbf16>, vector<2x32x16xbf16>, vector<2x8x16xf32> -> vector<2x8x16xf32>
    "tpu.trace_stop"() : () -> ()
    %cst_15 = arith.constant 2.500000e-01 : f32
    %19 = vector.broadcast %cst_15 : f32 to vector<2x8x16xf32>
    %20 = arith.mulf %14, %19 : vector<2x8x16xf32>
    %21 = arith.truncf %20 : vector<2x8x16xf32> to vector<2x8x16xbf16>
    %22 = arith.truncf %16 : vector<2x8x16xf32> to vector<2x8x16xbf16>
    %23 = arith.truncf %18 : vector<2x8x16xf32> to vector<2x8x16xbf16>
    "tpu.trace_start"() <{level = 10 : i32, message = "hqd,hkd->hqk"}> : () -> ()
    %cst_16 = arith.constant dense<0.000000e+00> : vector<2x8x8xf32>
    %24 = tpu.matmul %21, %22, %cst_16 {dimension_numbers = #tpu.dot_dimension_numbers<[2], [2], [1], [1], [0, 0, 0, 1, 1, 1], [0], [0]>} : vector<2x8x16xbf16>, vector<2x8x16xbf16>, vector<2x8x8xf32> -> vector<2x8x8xf32>
    "tpu.trace_stop"() : () -> ()
    %25 = vector.broadcast %9 : vector<1x1x8xf32> to vector<2x8x8xf32>
    %26 = arith.addf %24, %25 : vector<2x8x8xf32>
    %cst_17 = arith.constant dense<0xFF800000> : vector<2x8xf32>
    %27 = vector.multi_reduction <maximumf>, %26, %cst_17 [2] : vector<2x8x8xf32> to vector<2x8xf32>
    %28 = vector.shape_cast %27 : vector<2x8xf32> to vector<2x8x1xf32>
    %29 = vector.broadcast %28 : vector<2x8x1xf32> to vector<2x8x8xf32>
    %30 = arith.subf %26, %29 : vector<2x8x8xf32>
    %31 = math.exp %30 : vector<2x8x8xf32>
    %cst_18 = arith.constant dense<0.000000e+00> : vector<2x8xf32>
    %32 = vector.multi_reduction <add>, %31, %cst_18 [2] : vector<2x8x8xf32> to vector<2x8xf32>
    %33 = vector.shape_cast %32 : vector<2x8xf32> to vector<2x8x1xf32>
    %34 = tpu.reciprocal %33 {approx = true} : vector<2x8x1xf32> -> vector<2x8x1xf32>
    %35 = vector.broadcast %34 : vector<2x8x1xf32> to vector<2x8x8xf32>
    %36 = arith.mulf %31, %35 : vector<2x8x8xf32>
    %37 = arith.truncf %36 : vector<2x8x8xf32> to vector<2x8x8xbf16>
    "tpu.trace_start"() <{level = 10 : i32, message = "hqk,hkd->hqd"}> : () -> ()
    %cst_19 = arith.constant dense<0.000000e+00> : vector<2x8x16xf32>
    %38 = tpu.matmul %37, %23, %cst_19 {dimension_numbers = #tpu.dot_dimension_numbers<[2], [1], [1], [2], [0, 0, 0, 1, 1, 2], [0], [0]>} : vector<2x8x8xbf16>, vector<2x8x16xbf16>, vector<2x8x16xf32> -> vector<2x8x16xf32>
    "tpu.trace_stop"() : () -> ()
    %39 = arith.truncf %38 : vector<2x8x16xf32> to vector<2x8x16xbf16>
    %c0_20 = arith.constant 0 : index
    %c0_21 = arith.constant 0 : index
    %c0_22 = arith.constant 0 : index
    %40 = vector.load %arg6[%c0_20, %c0_21, %c0_22] : memref<2x16x32xbf16, #tpu.memory_space<vmem>>, vector<2x16x32xbf16>
    "tpu.trace_start"() <{level = 10 : i32, message = "hnd,hdc->hnc"}> : () -> ()
    %cst_23 = arith.constant dense<0.000000e+00> : vector<2x8x32xf32>
    %41 = tpu.matmul %39, %40, %cst_23 {dimension_numbers = #tpu.dot_dimension_numbers<[2], [1], [1], [2], [0, 0, 0, 1, 1, 2], [0], [0]>} : vector<2x8x16xbf16>, vector<2x16x32xbf16>, vector<2x8x32xf32> -> vector<2x8x32xf32>
    "tpu.trace_stop"() : () -> ()
    %cst_24 = arith.constant dense<0.000000e+00> : vector<8x32xf32>
    %42 = vector.multi_reduction <add>, %41, %cst_24 [0] : vector<2x8x32xf32> to vector<8x32xf32>
    %c0_25 = arith.constant 0 : index
    %c0_26 = arith.constant 0 : index
    %43 = vector.load %arg7[%c0_25, %c0_26] : memref<1x32xf32, #tpu.memory_space<vmem>>, vector<1x32xf32>
    %c0_27 = arith.constant 0 : index
    %c0_28 = arith.constant 0 : index
    %44 = vector.load %arg8[%c0_27, %c0_28] : memref<1x32xf32, #tpu.memory_space<vmem>>, vector<1x32xf32>
    %45 = arith.addf %1, %42 : vector<8x32xf32>
    %cst_29 = arith.constant dense<0.000000e+00> : vector<8xf32>
    %46 = vector.multi_reduction <add>, %45, %cst_29 [1] : vector<8x32xf32> to vector<8xf32>
    %47 = vector.shape_cast %46 : vector<8xf32> to vector<8x1xf32>
    %cst_30 = arith.constant 3.200000e+01 : f32
    %48 = vector.broadcast %cst_30 : f32 to vector<8x1xf32>
    %49 = arith.divf %47, %48 : vector<8x1xf32>
    %50 = vector.broadcast %49 : vector<8x1xf32> to vector<8x32xf32>
    %51 = arith.subf %45, %50 : vector<8x32xf32>
    %52 = arith.mulf %51, %51 : vector<8x32xf32>
    %cst_31 = arith.constant dense<0.000000e+00> : vector<8xf32>
    %53 = vector.multi_reduction <add>, %52, %cst_31 [1] : vector<8x32xf32> to vector<8xf32>
    %54 = vector.shape_cast %53 : vector<8xf32> to vector<8x1xf32>
    %cst_32 = arith.constant 3.200000e+01 : f32
    %55 = vector.broadcast %cst_32 : f32 to vector<8x1xf32>
    %56 = arith.divf %54, %55 : vector<8x1xf32>
    %57 = vector.broadcast %49 : vector<8x1xf32> to vector<8x32xf32>
    %58 = arith.subf %45, %57 : vector<8x32xf32>
    %cst_33 = arith.constant 9.99999974E-6 : f32
    %59 = vector.broadcast %cst_33 : f32 to vector<8x1xf32>
    %60 = arith.addf %56, %59 : vector<8x1xf32>
    %61 = math.rsqrt %60 : vector<8x1xf32>
    %62 = vector.broadcast %61 : vector<8x1xf32> to vector<8x32xf32>
    %63 = arith.mulf %58, %62 : vector<8x32xf32>
    %64 = vector.broadcast %43 : vector<1x32xf32> to vector<8x32xf32>
    %65 = arith.mulf %63, %64 : vector<8x32xf32>
    %66 = vector.broadcast %44 : vector<1x32xf32> to vector<8x32xf32>
    %67 = arith.addf %65, %66 : vector<8x32xf32>
    %68 = arith.truncf %67 : vector<8x32xf32> to vector<8x32xbf16>
    %c0_34 = arith.constant 0 : index
    %c0_35 = arith.constant 0 : index
    %69 = vector.load %arg9[%c0_34, %c0_35] : memref<32x64xbf16, #tpu.memory_space<vmem>>, vector<32x64xbf16>
    %cst_36 = arith.constant dense<0.000000e+00> : vector<8x64xf32>
    %70 = tpu.matmul %68, %69, %cst_36 {dimension_numbers = #tpu.dot_dimension_numbers<[1], [0], [0], [1], [0, 0, 1, 1], [], []>} : vector<8x32xbf16>, vector<32x64xbf16>, vector<8x64xf32> -> vector<8x64xf32>
    %c0_37 = arith.constant 0 : index
    %c0_38 = arith.constant 0 : index
    %71 = vector.load %arg10[%c0_37, %c0_38] : memref<1x64xf32, #tpu.memory_space<vmem>>, vector<1x64xf32>
    %72 = vector.broadcast %71 : vector<1x64xf32> to vector<8x64xf32>
    %73 = arith.addf %70, %72 : vector<8x64xf32>
    %cst_39 = arith.constant 0.000000e+00 : f32
    %74 = vector.broadcast %cst_39 : f32 to vector<8x64xf32>
    %75 = arith.maximumf %73, %74 : vector<8x64xf32>
    %76 = arith.truncf %75 : vector<8x64xf32> to vector<8x64xbf16>
    %c0_40 = arith.constant 0 : index
    %c0_41 = arith.constant 0 : index
    %77 = vector.load %arg11[%c0_40, %c0_41] : memref<64x32xbf16, #tpu.memory_space<vmem>>, vector<64x32xbf16>
    %cst_42 = arith.constant dense<0.000000e+00> : vector<8x32xf32>
    %78 = tpu.matmul %76, %77, %cst_42 {dimension_numbers = #tpu.dot_dimension_numbers<[1], [0], [0], [1], [0, 0, 1, 1], [], []>} : vector<8x64xbf16>, vector<64x32xbf16>, vector<8x32xf32> -> vector<8x32xf32>
    %c0_43 = arith.constant 0 : index
    %c0_44 = arith.constant 0 : index
    %79 = vector.load %arg12[%c0_43, %c0_44] : memref<1x32xf32, #tpu.memory_space<vmem>>, vector<1x32xf32>
    %80 = vector.broadcast %79 : vector<1x32xf32> to vector<8x32xf32>
    %81 = arith.addf %78, %80 : vector<8x32xf32>
    %82 = arith.addf %67, %81 : vector<8x32xf32>
    %cst_45 = arith.constant dense<0.000000e+00> : vector<8xf32>
    %83 = vector.multi_reduction <add>, %82, %cst_45 [1] : vector<8x32xf32> to vector<8xf32>
    %84 = vector.shape_cast %83 : vector<8xf32> to vector<8x1xf32>
    %cst_46 = arith.constant 3.200000e+01 : f32
    %85 = vector.broadcast %cst_46 : f32 to vector<8x1xf32>
    %86 = arith.divf %84, %85 : vector<8x1xf32>
    %87 = vector.broadcast %86 : vector<8x1xf32> to vector<8x32xf32>
    %88 = arith.subf %82, %87 : vector<8x32xf32>
    %89 = arith.mulf %88, %88 : vector<8x32xf32>
    %cst_47 = arith.constant dense<0.000000e+00> : vector<8xf32>
    %90 = vector.multi_reduction <add>, %89, %cst_47 [1] : vector<8x32xf32> to vector<8xf32>
    %91 = vector.shape_cast %90 : vector<8xf32> to vector<8x1xf32>
    %cst_48 = arith.constant 3.200000e+01 : f32
    %92 = vector.broadcast %cst_48 : f32 to vector<8x1xf32>
    %93 = arith.divf %91, %92 : vector<8x1xf32>
    %94 = vector.broadcast %86 : vector<8x1xf32> to vector<8x32xf32>
    %95 = arith.subf %82, %94 : vector<8x32xf32>
    %cst_49 = arith.constant 9.99999974E-6 : f32
    %96 = vector.broadcast %cst_49 : f32 to vector<8x1xf32>
    %97 = arith.addf %93, %96 : vector<8x1xf32>
    %98 = math.rsqrt %97 : vector<8x1xf32>
    %99 = vector.broadcast %98 : vector<8x1xf32> to vector<8x32xf32>
    %100 = arith.mulf %95, %99 : vector<8x32xf32>
    %101 = vector.broadcast %43 : vector<1x32xf32> to vector<8x32xf32>
    %102 = arith.mulf %100, %101 : vector<8x32xf32>
    %103 = vector.broadcast %44 : vector<1x32xf32> to vector<8x32xf32>
    %104 = arith.addf %102, %103 : vector<8x32xf32>
    %c0_50 = arith.constant 0 : index
    %c0_51 = arith.constant 0 : index
    %c0_52 = arith.constant 0 : index
    %105 = vector.load %arg13[%c0_50, %c0_51, %c0_52] : memref<1x8x32xf32, #tpu.memory_space<vmem>>, vector<1x8x32xf32>
    %106 = vector.shape_cast %105 : vector<1x8x32xf32> to vector<8x32xf32>
    %107 = vector.shape_cast %104 : vector<8x32xf32> to vector<1x8x32xf32>
    tpu.vector_store %arg13[%c0_50, %c0_51, %c0_52], %107 {strides = array<i32>} : memref<1x8x32xf32, #tpu.memory_space<vmem>>, vector<1x8x32xf32>,
    return
  }
  func.func @transform_0(%arg0: i32, %arg1: memref<2xi32, #tpu.memory_space<smem>>) -> (i32, i32, i32) {
    %c0_i32 = arith.constant 0 : i32
    %c0_i32_0 = arith.constant 0 : i32
    %c0_i32_1 = arith.constant 0 : i32
    return %arg0, %c0_i32, %c0_i32_0 : i32, i32, i32
  }
  func.func @transform_1(%arg0: i32, %arg1: memref<2xi32, #tpu.memory_space<smem>>) -> (i32, i32, i32) {
    %c0_i32 = arith.constant 0 : i32
    %c0_i32_0 = arith.constant 0 : i32
    %c0_i32_1 = arith.constant 0 : i32
    %c0_i32_2 = arith.constant 0 : i32
    return %c0_i32, %c0_i32_0, %c0_i32_1 : i32, i32, i32
  }
  func.func @transform_2(%arg0: i32, %arg1: memref<2xi32, #tpu.memory_space<smem>>) -> (i32, i32, i32) {
    %c0_i32 = arith.constant 0 : i32
    %c0_i32_0 = arith.constant 0 : i32
    %c0_i32_1 = arith.constant 0 : i32
    %c0_i32_2 = arith.constant 0 : i32
    return %c0_i32, %c0_i32_0, %c0_i32_1 : i32, i32, i32
  }
  func.func @transform_3(%arg0: i32, %arg1: memref<2xi32, #tpu.memory_space<smem>>) -> (i32, i32, i32) {
    %c0_i32 = arith.constant 0 : i32
    %c0_i32_0 = arith.constant 0 : i32
    %c0_i32_1 = arith.constant 0 : i32
    %c0_i32_2 = arith.constant 0 : i32
    return %c0_i32, %c0_i32_0, %c0_i32_1 : i32, i32, i32
  }
  func.func @transform_4(%arg0: i32, %arg1: memref<2xi32, #tpu.memory_space<smem>>) -> (i32, i32, i32) {
    %c0_i32 = arith.constant 0 : i32
    %c0_i32_0 = arith.constant 0 : i32
    %c0_i32_1 = arith.constant 0 : i32
    %c0_i32_2 = arith.constant 0 : i32
    return %c0_i32, %c0_i32_0, %c0_i32_1 : i32, i32, i32
  }
  func.func @transform_5(%arg0: i32, %arg1: memref<2xi32, #tpu.memory_space<smem>>) -> (i32, i32) {
    %c0_i32 = arith.constant 0 : i32
    %c0_i32_0 = arith.constant 0 : i32
    %c0_i32_1 = arith.constant 0 : i32
    return %c0_i32, %c0_i32_0 : i32, i32
  }
  func.func @transform_6(%arg0: i32, %arg1: memref<2xi32, #tpu.memory_space<smem>>) -> (i32, i32) {
    %c0_i32 = arith.constant 0 : i32
    %c0_i32_0 = arith.constant 0 : i32
    %c0_i32_1 = arith.constant 0 : i32
    return %c0_i32, %c0_i32_0 : i32, i32
  }
  func.func @transform_7(%arg0: i32, %arg1: memref<2xi32, #tpu.memory_space<smem>>) -> (i32, i32) {
    %c0_i32 = arith.constant 0 : i32
    %c0_i32_0 = arith.constant 0 : i32
    %c0_i32_1 = arith.constant 0 : i32
    return %c0_i32, %c0_i32_0 : i32, i32
  }
  func.func @transform_8(%arg0: i32, %arg1: memref<2xi32, #tpu.memory_space<smem>>) -> (i32, i32) {
    %c0_i32 = arith.constant 0 : i32
    %c0_i32_0 = arith.constant 0 : i32
    %c0_i32_1 = arith.constant 0 : i32
    return %c0_i32, %c0_i32_0 : i32, i32
  }
  func.func @transform_9(%arg0: i32, %arg1: memref<2xi32, #tpu.memory_space<smem>>) -> (i32, i32) {
    %c0_i32 = arith.constant 0 : i32
    %c0_i32_0 = arith.constant 0 : i32
    %c0_i32_1 = arith.constant 0 : i32
    return %c0_i32, %c0_i32_0 : i32, i32
  }
  func.func @transform_10(%arg0: i32, %arg1: memref<2xi32, #tpu.memory_space<smem>>) -> (i32, i32) {
    %c0_i32 = arith.constant 0 : i32
    %c0_i32_0 = arith.constant 0 : i32
    %c0_i32_1 = arith.constant 0 : i32
    return %c0_i32, %c0_i32_0 : i32, i32
  }
  func.func @transform_11(%arg0: i32, %arg1: memref<2xi32, #tpu.memory_space<smem>>) -> (i32, i32, i32) {
    %c0_i32 = arith.constant 0 : i32
    %c0_i32_0 = arith.constant 0 : i32
    %c0_i32_1 = arith.constant 0 : i32
    return %arg0, %c0_i32, %c0_i32_0 : i32, i32, i32
  }
}

</mosaic_0001>

<llo_original>
// kernel: tpu_custom_call.1
$region0: #{tpu_custom_call.1}
  #allocation0 [shape = 'u32[]', space=smem, size = 0x4, offset = 0x4, fixed_abs, tag = 'smem constant byte address 0x4 - core index']
  #allocation1 [shape = 'u32[144,128]{1,0:T(1,128)}', space=vmem, size = 0x12000, scoped, tag = 'internal scratch']
  #allocation2 [shape = 's32[1]{0}', space=sflag, size = 0x4, scoped, tag = 'scoped memory for tpu_custom_call.1']
  #allocation3 [shape = 'u8[512]{0}', space=smem, size = 0x200, scoped, tag = 'prefetched SMEM operand 0']
  %s0 = inlined_call_operand.hbm [shape: s32[2], index: 0, kind: input, shape index: {}]
  %s1 = inlined_call_operand.hbm [shape: f32[2,8,32], index: 1, kind: input, shape index: {}]
  %s2 = inlined_call_operand.hbm [shape: bf16[2,32,16], index: 2, kind: input, shape index: {}]
  %s3 = inlined_call_operand.hbm [shape: bf16[2,32,16], index: 3, kind: input, shape index: {}]
  %s4 = inlined_call_operand.hbm [shape: bf16[2,32,16], index: 4, kind: input, shape index: {}]
  %s5 = inlined_call_operand.hbm [shape: bf16[2,16,32], index: 5, kind: input, shape index: {}]
  %s6 = inlined_call_operand.hbm [shape: f32[1,32], index: 6, kind: input, shape index: {}]
  %s7 = inlined_call_operand.hbm [shape: f32[1,32], index: 7, kind: input, shape index: {}]
  %s8 = inlined_call_operand.hbm [shape: bf16[32,64], index: 8, kind: input, shape index: {}]
  %s9 = inlined_call_operand.hbm [shape: f32[1,64], index: 9, kind: input, shape index: {}]
  %s10 = inlined_call_operand.hbm [shape: bf16[64,32], index: 10, kind: input, shape index: {}]
  %s11 = inlined_call_operand.hbm [shape: f32[1,32], index: 11, kind: input, shape index: {}]
  %s12 = inlined_call_operand.hbm [shape: f32[2,8,32], index: 12, kind: output, shape index: {}]
  %s13 = sld [smem:[#allocation0]]
  $region121: #{tpu_custom_call.1} parent=0
    _
  %s15 = ssub.s32 1, %s13
  %s16 = scalar_select 0, %s15, %s13
  %18 = dma.hbm_to_smem %s0, 16, [#allocation3], [#allocation2]
  %19 = dma.done [#allocation2], 16
  %20 = sfence
  $region1: #{tpu_custom_call.1} parent=0
    #allocation4 [shape = 'u8[8192]{0}', space=vmem, size = 0x2000, scoped, tag = 'input window, operand 1']
    #allocation5 [shape = 's32[2]{0}', space=sflag, size = 0x8, scoped, tag = 'scoped memory for tpu_custom_call.1']
    #allocation6 [shape = 's32[2]{0}', space=sflag, size = 0x8, scoped, tag = 'scoped memory for tpu_custom_call.1']
    #allocation7 [shape = 'u8[16384]{0}', space=vmem, size = 0x4000, scoped, tag = 'input window, operand 2, single buffered']
    #allocation8 [shape = 's32[1]{0}', space=sflag, size = 0x4, scoped, tag = 'scoped memory for tpu_custom_call.1']
    #allocation9 [shape = 'u8[16384]{0}', space=vmem, size = 0x4000, scoped, tag = 'input window, operand 3, single buffered']
    #allocation10 [shape = 'u8[16384]{0}', space=vmem, size = 0x4000, scoped, tag = 'input window, operand 4, single buffered']
    #allocation11 [shape = 's32[1]{0}', space=sflag, size = 0x4, scoped, tag = 'scoped memory for tpu_custom_call.1']
    #allocation12 [shape = 'u8[8192]{0}', space=vmem, size = 0x2000, scoped, tag = 'input window, operand 5, single buffered']
    #allocation13 [shape = 'u8[512]{0}', space=vmem, size = 0x400, scoped, tag = 'input window, operand 6, single buffered']
    #allocation14 [shape = 's32[1]{0}', space=sflag, size = 0x4, scoped, tag = 'scoped memory for tpu_custom_call.1']
    #allocation15 [shape = 'u8[512]{0}', space=vmem, size = 0x400, scoped, tag = 'input window, operand 7, single buffered']
    #allocation16 [shape = 'u8[8192]{0}', space=vmem, size = 0x2000, scoped, tag = 'input window, operand 8, single buffered']
    #allocation17 [shape = 's32[1]{0}', space=sflag, size = 0x4, scoped, tag = 'scoped memory for tpu_custom_call.1']
    #allocation18 [shape = 'u8[512]{0}', space=vmem, size = 0x400, scoped, tag = 'input window, operand 9, single buffered']
    #allocation19 [shape = 'u8[16384]{0}', space=vmem, size = 0x4000, scoped, tag = 'input window, operand 10, single buffered']
    #allocation20 [shape = 's32[1]{0}', space=sflag, size = 0x4, scoped, tag = 'scoped memory for tpu_custom_call.1']
    #allocation21 [shape = 'u8[512]{0}', space=vmem, size = 0x400, scoped, tag = 'input window, operand 11, single buffered']
    #allocation22 [shape = 'u8[8192]{0}', space=vmem, size = 0x2000, scoped, tag = 'output window, operand 0']
    %21 = vsyncpa [#allocation5], 0
    %s22 = scalar_lea.sflag [#allocation5], 1
    %23 = vsyncpa %s22, 0
    %24 = vsyncpa [#allocation8], 0
    %25 = vsyncpa [#allocation11], 0
    %26 = vsyncpa [#allocation14], 0
    %27 = vsyncpa [#allocation17], 0
    %28 = vsyncpa [#allocation20], 0
    %29 = vsyncpa [#allocation6], 0
    %s30 = scalar_lea.sflag [#allocation6], 1
    %31 = vsyncpa %s30, 0
    loop: start=0, step=1, limit=4
    $region2: #{tpu_custom_call.1} parent=1 // loop_pre_header
      _
    $region3: #{tpu_custom_call.1} parent=1 // loop_header
      %s33 = sphi 0, %s37
      %p34 = scmp.ge.s32.totalorder %s33, 4
      %s43 = sphi 0, %s45
      %s46 = sphi 0, %s43
      %s47 = sphi 0, %s46
      %s63 = sphi 0, %s47
      %s67 = sphi 0, %s67
      %s69 = sphi 0, %s67
      %s70 = sphi 0, %s69
      %s84 = sphi 0, %s70
      %s88 = sphi 0, %s88
      %s90 = sphi 0, %s88
      %s91 = sphi 0, %s90
      %s105 = sphi 0, %s91
      %s109 = sphi 0, %s109
      %s111 = sphi 0, %s109
      %s112 = sphi 0, %s111
      %s126 = sphi 0, %s112
      %s130 = sphi 0, %s130
      %s132 = sphi 0, %s130
      %s133 = sphi 0, %s132
      %s147 = sphi 0, %s133
      %s151 = sphi 0, %s151
      %s153 = sphi 0, %s151
      %s154 = sphi 0, %s153
      %s168 = sphi 0, %s154
      %s172 = sphi 0, %s172
      %s174 = sphi 0, %s172
      %s175 = sphi 0, %s174
      %s189 = sphi 0, %s175
      %s193 = sphi 0, %s193
      %s195 = sphi 0, %s193
      %s196 = sphi 0, %s195
      %s210 = sphi 0, %s196
      %s214 = sphi 0, %s214
      %s216 = sphi 0, %s214
      %s217 = sphi 0, %s216
      %s231 = sphi 0, %s217
      %s235 = sphi 0, %s235
      %s237 = sphi 0, %s235
      %s238 = sphi 0, %s237
      %s252 = sphi 0, %s238
      %s256 = sphi 0, %s256
      %s258 = sphi 0, %s256
      %s259 = sphi 0, %s258
      %s273 = sphi 0, %s259
      %s279 = sphi 0, %s281
      %s282 = sphi 0, %s279
      %s283 = sphi 0, %s282
      %s299 = sphi 0, %s283
    $region4: #{tpu_custom_call.1} parent=1 // loop_header_branch
      %36 = sbr.rel (%p34) target = $region8
    $region5: #{tpu_custom_call.1} parent=1 // loop_body
      %s38 = ssub.s32 %s33, 1
      %s39 = ssub.s32 %s33, 2
      %s40 = sadd.s32 %s33, 1
      %s41 = ssub.s32 %s33, %s40
      %p42 = scmp.eq.s32.totalorder %s41, 0
      %s44 = sadd.s32 %s43, 1
      %s45 = scalar_select %p42, %s43, %s44
      %p48 = pneg %p42
      %p49 = scmp.eq.s32.totalorder %s33, 1
      %p50 = por %p48, %p49
      %p51 = scmp.ne.s32.totalorder %s43, %s46
      %p52 = scmp.eq.s32.totalorder %s33, 0
      %p53 = por %p51, %p52
      %p54 = scmp.ne.s32.totalorder %s43, %s46
      %p55 = scmp.eq.s32.totalorder %s38, 1
      %p56 = por %p54, %p55
      %p57 = scmp.ne.s32.totalorder %s46, %s47
      %p58 = scmp.eq.s32.totalorder %s38, 0
      %p59 = por %p57, %p58
      %p60 = scmp.ne.s32.totalorder %s46, %s47
      %p61 = scmp.eq.s32.totalorder %s39, 1
      %p62 = por %p60, %p61
      %p64 = scmp.ne.s32.totalorder %s47, %s63
      %p65 = scmp.eq.s32.totalorder %s39, 0
      %p66 = por %p64, %p65
      %s68 = sadd.s32 %s67, 1
      %p71 = scmp.eq.s32.totalorder %s33, 1
      %p72 = scmp.ne.s32.totalorder %s67, %s69
      %p73 = scmp.eq.s32.totalorder %s33, 0
      %p74 = por %p72, %p73
      %p75 = scmp.ne.s32.totalorder %s67, %s69
      %p76 = scmp.eq.s32.totalorder %s38, 1
      %p77 = por %p75, %p76
      %p78 = scmp.ne.s32.totalorder %s69, %s70
      %p79 = scmp.eq.s32.totalorder %s38, 0
      %p80 = por %p78, %p79
      %p81 = scmp.ne.s32.totalorder %s69, %s70
      %p82 = scmp.eq.s32.totalorder %s39, 1
      %p83 = por %p81, %p82
      %p85 = scmp.ne.s32.totalorder %s70, %s84
      %p86 = scmp.eq.s32.totalorder %s39, 0
      %p87 = por %p85, %p86
      %s89 = sadd.s32 %s88, 1
      %p92 = scmp.eq.s32.totalorder %s33, 1
      %p93 = scmp.ne.s32.totalorder %s88, %s90
      %p94 = scmp.eq.s32.totalorder %s33, 0
      %p95 = por %p93, %p94
      %p96 = scmp.ne.s32.totalorder %s88, %s90
      %p97 = scmp.eq.s32.totalorder %s38, 1
      %p98 = por %p96, %p97
      %p99 = scmp.ne.s32.totalorder %s90, %s91
      %p100 = scmp.eq.s32.totalorder %s38, 0
      %p101 = por %p99, %p100
      %p102 = scmp.ne.s32.totalorder %s90, %s91
      %p103 = scmp.eq.s32.totalorder %s39, 1
      %p104 = por %p102, %p103
      %p106 = scmp.ne.s32.totalorder %s91, %s105
      %p107 = scmp.eq.s32.totalorder %s39, 0
      %p108 = por %p106, %p107
      %s110 = sadd.s32 %s109, 1
      %p113 = scmp.eq.s32.totalorder %s33, 1
      %p114 = scmp.ne.s32.totalorder %s109, %s111
      %p115 = scmp.eq.s32.totalorder %s33, 0
      %p116 = por %p114, %p115
      %p117 = scmp.ne.s32.totalorder %s109, %s111
      %p118 = scmp.eq.s32.totalorder %s38, 1
      %p119 = por %p117, %p118
      %p120 = scmp.ne.s32.totalorder %s111, %s112
      %p121 = scmp.eq.s32.totalorder %s38, 0
      %p122 = por %p120, %p121
      %p123 = scmp.ne.s32.totalorder %s111, %s112
      %p124 = scmp.eq.s32.totalorder %s39, 1
      %p125 = por %p123, %p124
      %p127 = scmp.ne.s32.totalorder %s112, %s126
      %p128 = scmp.eq.s32.totalorder %s39, 0
      %p129 = por %p127, %p128
      %s131 = sadd.s32 %s130, 1
      %p134 = scmp.eq.s32.totalorder %s33, 1
      %p135 = scmp.ne.s32.totalorder %s130, %s132
      %p136 = scmp.eq.s32.totalorder %s33, 0
      %p137 = por %p135, %p136
      %p138 = scmp.ne.s32.totalorder %s130, %s132
      %p139 = scmp.eq.s32.totalorder %s38, 1
      %p140 = por %p138, %p139
      %p141 = scmp.ne.s32.totalorder %s132, %s133
      %p142 = scmp.eq.s32.totalorder %s38, 0
      %p143 = por %p141, %p142
      %p144 = scmp.ne.s32.totalorder %s132, %s133
      %p145 = scmp.eq.s32.totalorder %s39, 1
      %p146 = por %p144, %p145
      %p148 = scmp.ne.s32.totalorder %s133, %s147
      %p149 = scmp.eq.s32.totalorder %s39, 0
      %p150 = por %p148, %p149
      %s152 = sadd.s32 %s151, 1
      %p155 = scmp.eq.s32.totalorder %s33, 1
      %p156 = scmp.ne.s32.totalorder %s151, %s153
      %p157 = scmp.eq.s32.totalorder %s33, 0
      %p158 = por %p156, %p157
      %p159 = scmp.ne.s32.totalorder %s151, %s153
      %p160 = scmp.eq.s32.totalorder %s38, 1
      %p161 = por %p159, %p160
      %p162 = scmp.ne.s32.totalorder %s153, %s154
      %p163 = scmp.eq.s32.totalorder %s38, 0
      %p164 = por %p162, %p163
      %p165 = scmp.ne.s32.totalorder %s153, %s154
      %p166 = scmp.eq.s32.totalorder %s39, 1
      %p167 = por %p165, %p166
      %p169 = scmp.ne.s32.totalorder %s154, %s168
      %p170 = scmp.eq.s32.totalorder %s39, 0
      %p171 = por %p169, %p170
      %s173 = sadd.s32 %s172, 1
      %p176 = scmp.eq.s32.totalorder %s33, 1
      %p177 = scmp.ne.s32.totalorder %s172, %s174
      %p178 = scmp.eq.s32.totalorder %s33, 0
      %p179 = por %p177, %p178
      %p180 = scmp.ne.s32.totalorder %s172, %s174
      %p181 = scmp.eq.s32.totalorder %s38, 1
      %p182 = por %p180, %p181
      %p183 = scmp.ne.s32.totalorder %s174, %s175
      %p184 = scmp.eq.s32.totalorder %s38, 0
      %p185 = por %p183, %p184
      %p186 = scmp.ne.s32.totalorder %s174, %s175
      %p187 = scmp.eq.s32.totalorder %s39, 1
      %p188 = por %p186, %p187
      %p190 = scmp.ne.s32.totalorder %s175, %s189
      %p191 = scmp.eq.s32.totalorder %s39, 0
      %p192 = por %p190, %p191
      %s194 = sadd.s32 %s193, 1
      %p197 = scmp.eq.s32.totalorder %s33, 1
      %p198 = scmp.ne.s32.totalorder %s193, %s195
      %p199 = scmp.eq.s32.totalorder %s33, 0
      %p200 = por %p198, %p199
      %p201 = scmp.ne.s32.totalorder %s193, %s195
      %p202 = scmp.eq.s32.totalorder %s38, 1
      %p203 = por %p201, %p202
      %p204 = scmp.ne.s32.totalorder %s195, %s196
      %p205 = scmp.eq.s32.totalorder %s38, 0
      %p206 = por %p204, %p205
      %p207 = scmp.ne.s32.totalorder %s195, %s196
      %p208 = scmp.eq.s32.totalorder %s39, 1
      %p209 = por %p207, %p208
      %p211 = scmp.ne.s32.totalorder %s196, %s210
      %p212 = scmp.eq.s32.totalorder %s39, 0
      %p213 = por %p211, %p212
      %s215 = sadd.s32 %s214, 1
      %p218 = scmp.eq.s32.totalorder %s33, 1
      %p219 = scmp.ne.s32.totalorder %s214, %s216
      %p220 = scmp.eq.s32.totalorder %s33, 0
      %p221 = por %p219, %p220
      %p222 = scmp.ne.s32.totalorder %s214, %s216
      %p223 = scmp.eq.s32.totalorder %s38, 1
      %p224 = por %p222, %p223
      %p225 = scmp.ne.s32.totalorder %s216, %s217
      %p226 = scmp.eq.s32.totalorder %s38, 0
      %p227 = por %p225, %p226
      %p228 = scmp.ne.s32.totalorder %s216, %s217
      %p229 = scmp.eq.s32.totalorder %s39, 1
      %p230 = por %p228, %p229
      %p232 = scmp.ne.s32.totalorder %s217, %s231
      %p233 = scmp.eq.s32.totalorder %s39, 0
      %p234 = por %p232, %p233
      %s236 = sadd.s32 %s235, 1
      %p239 = scmp.eq.s32.totalorder %s33, 1
      %p240 = scmp.ne.s32.totalorder %s235, %s237
      %p241 = scmp.eq.s32.totalorder %s33, 0
      %p242 = por %p240, %p241
      %p243 = scmp.ne.s32.totalorder %s235, %s237
      %p244 = scmp.eq.s32.totalorder %s38, 1
      %p245 = por %p243, %p244
      %p246 = scmp.ne.s32.totalorder %s237, %s238
      %p247 = scmp.eq.s32.totalorder %s38, 0
      %p248 = por %p246, %p247
      %p249 = scmp.ne.s32.totalorder %s237, %s238
      %p250 = scmp.eq.s32.totalorder %s39, 1
      %p251 = por %p249, %p250
      %p253 = scmp.ne.s32.totalorder %s238, %s252
      %p254 = scmp.eq.s32.totalorder %s39, 0
      %p255 = por %p253, %p254
      %s257 = sadd.s32 %s256, 1
      %p260 = scmp.eq.s32.totalorder %s33, 1
      %p261 = scmp.ne.s32.totalorder %s256, %s258
      %p262 = scmp.eq.s32.totalorder %s33, 0
      %p263 = por %p261, %p262
      %p264 = scmp.ne.s32.totalorder %s256, %s258
      %p265 = scmp.eq.s32.totalorder %s38, 1
      %p266 = por %p264, %p265
      %p267 = scmp.ne.s32.totalorder %s258, %s259
      %p268 = scmp.eq.s32.totalorder %s38, 0
      %p269 = por %p267, %p268
      %p270 = scmp.ne.s32.totalorder %s258, %s259
      %p271 = scmp.eq.s32.totalorder %s39, 1
      %p272 = por %p270, %p271
      %p274 = scmp.ne.s32.totalorder %s259, %s273
      %p275 = scmp.eq.s32.totalorder %s39, 0
      %p276 = por %p274, %p275
      %s277 = ssub.s32 %s33, %s40
      %p278 = scmp.eq.s32.totalorder %s277, 0
      %s280 = sadd.s32 %s279, 1
      %s281 = scalar_select %p278, %s279, %s280
      %p284 = pneg %p278
      %p285 = scmp.eq.s32.totalorder %s33, 1
      %p286 = por %p284, %p285
      %p287 = scmp.ne.s32.totalorder %s279, %s282
      %p288 = scmp.eq.s32.totalorder %s33, 0
      %p289 = por %p287, %p288
      %p290 = scmp.ne.s32.totalorder %s279, %s282
      %p291 = scmp.eq.s32.totalorder %s38, 1
      %p292 = por %p290, %p291
      %p293 = scmp.ne.s32.totalorder %s282, %s283
      %p294 = scmp.eq.s32.totalorder %s38, 0
      %p295 = por %p293, %p294
      %p296 = scmp.ne.s32.totalorder %s282, %s283
      %p297 = scmp.eq.s32.totalorder %s39, 1
      %p298 = por %p296, %p297
      %p300 = scmp.ne.s32.totalorder %s283, %s299
      %p301 = scmp.eq.s32.totalorder %s39, 0
      %p302 = por %p300, %p301
      %p303 = scmp.le.s32.totalorder 1, %s33
      %p304 = scmp.lt.s32.totalorder %s33, 3
      %p305 = pnand %p303, %p304
      %p306 = pneg %p305
      // Predicated region
      $region9: #{tpu_custom_call.1} parent=5 // pred_check
        _
      $region10: #{tpu_custom_call.1} parent=5 // pred_check_branch
        %308 = sbr.rel (%p305) target = $region12
      $region11: #{tpu_custom_call.1} parent=5 // pred_region
        %s309 = ssub.s32 %s33, 1
        // Predicated region
        $region13: #{tpu_custom_call.1} parent=11 // pred_check
          %p310 = pneg %p80
        $region14: #{tpu_custom_call.1} parent=11 // pred_check_branch
          %312 = sbr.rel (%p310) target = $region16
        $region15: #{tpu_custom_call.1} parent=11 // pred_region
          %s314 = ssub.s32 512, 512
          %315 = vsyncadd [#allocation8], %s314
          %s316 = sshll.u32 [#allocation7], 4
          %s317 = int_to_ptr.vmem [resolvable:$true] %s316
          %322 = dma.hbm_to_vmem [thread:$0]  %s2, 512, %s317, [#allocation8], 64, 64, 4
        $region16: #{tpu_custom_call.1} parent=11 // pred_fallthru
          _
        // Predicated region
        $region17: #{tpu_custom_call.1} parent=11 // pred_check
          %p323 = pneg %p101
        $region18: #{tpu_custom_call.1} parent=11 // pred_check_branch
          %325 = sbr.rel (%p323) target = $region20
        $region19: #{tpu_custom_call.1} parent=11 // pred_region
          %s327 = ssub.s32 512, 512
          %328 = vsyncadd [#allocation8], %s327
          %s329 = sshll.u32 [#allocation9], 4
          %s330 = int_to_ptr.vmem [resolvable:$true] %s329
          %335 = dma.hbm_to_vmem [thread:$0]  %s3, 512, %s330, [#allocation8], 64, 64, 4
        $region20: #{tpu_custom_call.1} parent=11 // pred_fallthru
          _
        // Predicated region
        $region21: #{tpu_custom_call.1} parent=11 // pred_check
          %p336 = pneg %p122
        $region22: #{tpu_custom_call.1} parent=11 // pred_check_branch
          %338 = sbr.rel (%p336) target = $region24
        $region23: #{tpu_custom_call.1} parent=11 // pred_region
          %s340 = ssub.s32 512, 512
          %341 = vsyncadd [#allocation11], %s340
          %s342 = sshll.u32 [#allocation10], 4
          %s343 = int_to_ptr.vmem [resolvable:$true] %s342
          %348 = dma.hbm_to_vmem [thread:$0]  %s4, 512, %s343, [#allocation11], 64, 64, 4
        $region24: #{tpu_custom_call.1} parent=11 // pred_fallthru
          _
        // Predicated region
        $region25: #{tpu_custom_call.1} parent=11 // pred_check
          %p349 = pneg %p143
        $region26: #{tpu_custom_call.1} parent=11 // pred_check_branch
          %351 = sbr.rel (%p349) target = $region28
        $region27: #{tpu_custom_call.1} parent=11 // pred_region
          %s353 = ssub.s32 256, 256
          %354 = vsyncadd [#allocation11], %s353
          %s355 = sshll.u32 [#allocation12], 4
          %s356 = int_to_ptr.vmem [resolvable:$true] %s355
          %361 = dma.hbm_to_vmem [thread:$0]  %s5, 256, %s356, [#allocation11], 64, 64, 4
        $region28: #{tpu_custom_call.1} parent=11 // pred_fallthru
          _
        // Predicated region
        $region29: #{tpu_custom_call.1} parent=11 // pred_check
          %p362 = pneg %p164
        $region30: #{tpu_custom_call.1} parent=11 // pred_check_branch
          %364 = sbr.rel (%p362) target = $region32
        $region31: #{tpu_custom_call.1} parent=11 // pred_region
          %s366 = ssub.s32 16, 16
          %367 = vsyncadd [#allocation14], %s366
          %s369 = sshll.u32 [#allocation13], 4
          %s370 = int_to_ptr.vmem [resolvable:$true] %s369
          %372 = dma.hbm_to_vmem [thread:$0]  %s6, 16, %s370, [#allocation14]
        $region32: #{tpu_custom_call.1} parent=11 // pred_fallthru
          _
        // Predicated region
        $region33: #{tpu_custom_call.1} parent=11 // pred_check
          %p373 = pneg %p185
        $region34: #{tpu_custom_call.1} parent=11 // pred_check_branch
          %375 = sbr.rel (%p373) target = $region36
        $region35: #{tpu_custom_call.1} parent=11 // pred_region
          %s377 = ssub.s32 16, 16
          %378 = vsyncadd [#allocation14], %s377
          %s380 = sshll.u32 [#allocation15], 4
          %s381 = int_to_ptr.vmem [resolvable:$true] %s380
          %383 = dma.hbm_to_vmem [thread:$0]  %s7, 16, %s381, [#allocation14]
        $region36: #{tpu_custom_call.1} parent=11 // pred_fallthru
          _
        // Predicated region
        $region37: #{tpu_custom_call.1} parent=11 // pred_check
          %p384 = pneg %p206
        $region38: #{tpu_custom_call.1} parent=11 // pred_check_branch
          %386 = sbr.rel (%p384) target = $region40
        $region39: #{tpu_custom_call.1} parent=11 // pred_region
          %s388 = ssub.s32 256, 256
          %389 = vsyncadd [#allocation17], %s388
          %s390 = sshll.u32 [#allocation16], 4
          %s391 = int_to_ptr.vmem [resolvable:$true] %s390
          %396 = dma.hbm_to_vmem [thread:$0]  %s8, 256, %s391, [#allocation17], 64, 64, 4
        $region40: #{tpu_custom_call.1} parent=11 // pred_fallthru
          _
        // Predicated region
        $region41: #{tpu_custom_call.1} parent=11 // pred_check
          %p397 = pneg %p227
        $region42: #{tpu_custom_call.1} parent=11 // pred_check_branch
          %399 = sbr.rel (%p397) target = $region44
        $region43: #{tpu_custom_call.1} parent=11 // pred_region
          %s401 = ssub.s32 16, 16
          %402 = vsyncadd [#allocation17], %s401
          %s404 = sshll.u32 [#allocation18], 4
          %s405 = int_to_ptr.vmem [resolvable:$true] %s404
          %407 = dma.hbm_to_vmem [thread:$0]  %s9, 16, %s405, [#allocation17]
        $region44: #{tpu_custom_call.1} parent=11 // pred_fallthru
          _
        // Predicated region
        $region45: #{tpu_custom_call.1} parent=11 // pred_check
          %p408 = pneg %p248
        $region46: #{tpu_custom_call.1} parent=11 // pred_check_branch
          %410 = sbr.rel (%p408) target = $region48
        $region47: #{tpu_custom_call.1} parent=11 // pred_region
          %s412 = ssub.s32 512, 512
          %413 = vsyncadd [#allocation20], %s412
          %s414 = sshll.u32 [#allocation19], 4
          %s415 = int_to_ptr.vmem [resolvable:$true] %s414
          %420 = dma.hbm_to_vmem [thread:$0]  %s10, 512, %s415, [#allocation20], 64, 64, 4
        $region48: #{tpu_custom_call.1} parent=11 // pred_fallthru
          _
        // Predicated region
        $region49: #{tpu_custom_call.1} parent=11 // pred_check
          %p421 = pneg %p269
        $region50: #{tpu_custom_call.1} parent=11 // pred_check_branch
          %423 = sbr.rel (%p421) target = $region52
        $region51: #{tpu_custom_call.1} parent=11 // pred_region
          %s425 = ssub.s32 16, 16
          %426 = vsyncadd [#allocation20], %s425
          %s428 = sshll.u32 [#allocation21], 4
          %s429 = int_to_ptr.vmem [resolvable:$true] %s428
          %431 = dma.hbm_to_vmem [thread:$0]  %s11, 16, %s429, [#allocation20]
        $region52: #{tpu_custom_call.1} parent=11 // pred_fallthru
          _
      $region12: #{tpu_custom_call.1} parent=5 // pred_fallthru
        _
      %p432 = scmp.lt.s32.totalorder %s33, 2
      // Predicated region
      $region53: #{tpu_custom_call.1} parent=5 // pred_check
        %p433 = pneg %p432
      $region54: #{tpu_custom_call.1} parent=5 // pred_check_branch
        %435 = sbr.rel (%p433) target = $region56
      $region55: #{tpu_custom_call.1} parent=5 // pred_region
        // Predicated region
        $region57: #{tpu_custom_call.1} parent=55 // pred_check
          %p436 = pneg %p53
        $region58: #{tpu_custom_call.1} parent=55 // pred_check_branch
          %438 = sbr.rel (%p436) target = $region60
        $region59: #{tpu_custom_call.1} parent=55 // pred_region
          %s439 = sand.u32 %s43, 1
          %s440 = scalar_lea.sflag [#allocation5], %s439
          %s441 = sand.u32 %s43, 1
          %s442 = smul.addr %s441, 8
          %s443 = scalar_lea.vmem [#allocation4], %s442
          %s445 = ssub.s32 128, 128
          %446 = vsyncadd %s440, %s445
          %s447 = smul.addr %s33, 128
          %s448 = scalar_lea.hbm %s1, %s447
          %s450 = sshll.u32 %s443, 4
          %s451 = int_to_ptr.vmem [resolvable:$true] %s450
          %453 = dma.hbm_to_vmem [thread:$0]  %s448, 128, %s451, %s440
        $region60: #{tpu_custom_call.1} parent=55 // pred_fallthru
          _
      $region56: #{tpu_custom_call.1} parent=5 // pred_fallthru
        _
      %p454 = scmp.le.s32.totalorder 1, %s33
      %p455 = scmp.lt.s32.totalorder %s33, 3
      %p456 = pnand %p454, %p455
      %p457 = pneg %p456
      // Predicated region
      $region61: #{tpu_custom_call.1} parent=5 // pred_check
        _
      $region62: #{tpu_custom_call.1} parent=5 // pred_check_branch
        %459 = sbr.rel (%p456) target = $region64
      $region63: #{tpu_custom_call.1} parent=5 // pred_region
        %s460 = ssub.s32 %s33, 1
        %s461 = sand.u32 %s46, 1
        %s462 = scalar_lea.sflag [#allocation5], %s461
        %s463 = sand.u32 %s46, 1
        %s464 = smul.addr %s463, 8
        %s465 = scalar_lea.vmem [#allocation4], %s464
        // Predicated region
        $region65: #{tpu_custom_call.1} parent=63 // pred_check
          %p466 = pneg %p59
        $region66: #{tpu_custom_call.1} parent=63 // pred_check_branch
          %468 = sbr.rel (%p466) target = $region68
        $region67: #{tpu_custom_call.1} parent=63 // pred_region
          %469 = dma.done %s462, 128
        $region68: #{tpu_custom_call.1} parent=63 // pred_fallthru
          _
        // Predicated region
        $region69: #{tpu_custom_call.1} parent=63 // pred_check
          %p470 = pneg %p80
        $region70: #{tpu_custom_call.1} parent=63 // pred_check_branch
          %472 = sbr.rel (%p470) target = $region72
        $region71: #{tpu_custom_call.1} parent=63 // pred_region
          %473 = dma.done [#allocation8], 512
        $region72: #{tpu_custom_call.1} parent=63 // pred_fallthru
          _
        // Predicated region
        $region73: #{tpu_custom_call.1} parent=63 // pred_check
          %p474 = pneg %p101
        $region74: #{tpu_custom_call.1} parent=63 // pred_check_branch
          %476 = sbr.rel (%p474) target = $region76
        $region75: #{tpu_custom_call.1} parent=63 // pred_region
          %477 = dma.done [#allocation8], 512
        $region76: #{tpu_custom_call.1} parent=63 // pred_fallthru
          _
        // Predicated region
        $region77: #{tpu_custom_call.1} parent=63 // pred_check
          %p478 = pneg %p122
        $region78: #{tpu_custom_call.1} parent=63 // pred_check_branch
          %480 = sbr.rel (%p478) target = $region80
        $region79: #{tpu_custom_call.1} parent=63 // pred_region
          %481 = dma.done [#allocation11], 512
        $region80: #{tpu_custom_call.1} parent=63 // pred_fallthru
          _
        // Predicated region
        $region81: #{tpu_custom_call.1} parent=63 // pred_check
          %p482 = pneg %p143
        $region82: #{tpu_custom_call.1} parent=63 // pred_check_branch
          %484 = sbr.rel (%p482) target = $region84
        $region83: #{tpu_custom_call.1} parent=63 // pred_region
          %485 = dma.done [#allocation11], 256
        $region84: #{tpu_custom_call.1} parent=63 // pred_fallthru
          _
        // Predicated region
        $region85: #{tpu_custom_call.1} parent=63 // pred_check
          %p486 = pneg %p164
        $region86: #{tpu_custom_call.1} parent=63 // pred_check_branch
          %488 = sbr.rel (%p486) target = $region88
        $region87: #{tpu_custom_call.1} parent=63 // pred_region
          %489 = dma.done [#allocation14], 16
        $region88: #{tpu_custom_call.1} parent=63 // pred_fallthru
          _
        // Predicated region
        $region89: #{tpu_custom_call.1} parent=63 // pred_check
          %p490 = pneg %p185
        $region90: #{tpu_custom_call.1} parent=63 // pred_check_branch
          %492 = sbr.rel (%p490) target = $region92
        $region91: #{tpu_custom_call.1} parent=63 // pred_region
          %493 = dma.done [#allocation14], 16
        $region92: #{tpu_custom_call.1} parent=63 // pred_fallthru
          _
        // Predicated region
        $region93: #{tpu_custom_call.1} parent=63 // pred_check
          %p494 = pneg %p206
        $region94: #{tpu_custom_call.1} parent=63 // pred_check_branch
          %496 = sbr.rel (%p494) target = $region96
        $region95: #{tpu_custom_call.1} parent=63 // pred_region
          %497 = dma.done [#allocation17], 256
        $region96: #{tpu_custom_call.1} parent=63 // pred_fallthru
          _
        // Predicated region
        $region97: #{tpu_custom_call.1} parent=63 // pred_check
          %p498 = pneg %p227
        $region98: #{tpu_custom_call.1} parent=63 // pred_check_branch
          %500 = sbr.rel (%p498) target = $region100
        $region99: #{tpu_custom_call.1} parent=63 // pred_region
          %501 = dma.done [#allocation17], 16
        $region100: #{tpu_custom_call.1} parent=63 // pred_fallthru
          _
        // Predicated region
        $region101: #{tpu_custom_call.1} parent=63 // pred_check
          %p502 = pneg %p248
        $region102: #{tpu_custom_call.1} parent=63 // pred_check_branch
          %504 = sbr.rel (%p502) target = $region104
        $region103: #{tpu_custom_call.1} parent=63 // pred_region
          %505 = dma.done [#allocation20], 512
        $region104: #{tpu_custom_call.1} parent=63 // pred_fallthru
          _
        // Predicated region
        $region105: #{tpu_custom_call.1} parent=63 // pred_check
          %p506 = pneg %p269
        $region106: #{tpu_custom_call.1} parent=63 // pred_check_branch
          %508 = sbr.rel (%p506) target = $region108
        $region107: #{tpu_custom_call.1} parent=63 // pred_region
          %509 = dma.done [#allocation20], 16
        $region108: #{tpu_custom_call.1} parent=63 // pred_fallthru
          _
        %s510 = sand.u32 %s46, 1
        %s511 = scalar_lea.sflag [#allocation5], %s510
        %s512 = sand.u32 %s46, 1
        %s513 = smul.addr %s512, 8
        %s514 = scalar_lea.vmem [#allocation4], %s513
        %p515 = pneg %p59
        %p516 = pneg %p56
        %p517 = pneg %p80
        %p518 = pneg %p77
        %p519 = pneg %p101
        %p520 = pneg %p98
        %p521 = pneg %p122
        %p522 = pneg %p119
        %p523 = pneg %p143
        %p524 = pneg %p140
        %p525 = pneg %p164
        %p526 = pneg %p161
        %p527 = pneg %p185
        %p528 = pneg %p182
        %p529 = pneg %p206
        %p530 = pneg %p203
        %p531 = pneg %p227
        %p532 = pneg %p224
        %p533 = pneg %p248
        %p534 = pneg %p245
        %p535 = pneg %p269
        %p536 = pneg %p266
        %p537 = pneg %p295
        %p538 = pneg %p292
        %s539 = sand.u32 %s282, 1
        %s540 = scalar_lea.sflag [#allocation6], %s539
        %s541 = sand.u32 %s282, 1
        %s542 = smul.addr %s541, 8
        %s543 = scalar_lea.vmem [#allocation22], %s542
        %v545 = vld [vmem:[%s465] sm:$0xff]
        %s546 = sld [smem:[#allocation3 + %s38]]
        %v547 = vlaneseq
        %v548 = vand.u32 %v547, 127
        %v549 = vstv %s546
        %vm550 = vcmp.lt.s32.totalorder %v548, %v549
        %v551 = vsel %vm550, 0.0, -1e+30
        %v552 = vpack.c.bf16 %v545, %v545
        %v553 = vld [vmem:[#allocation7] sm:$0xf]
        %v554 = vld [vmem:[#allocation7 + $0x4] sm:$0xf]
        %v555 = vld [vmem:[#allocation7 + $0x8] sm:$0xf]
        %v556 = vld [vmem:[#allocation7 + $0xc] sm:$0xf]
        %v557 = vld [vmem:[#allocation7 + $0x10] sm:$0xf]
        %v558 = vld [vmem:[#allocation7 + $0x14] sm:$0xf]
        %v559 = vld [vmem:[#allocation7 + $0x18] sm:$0xf]
        %v560 = vld [vmem:[#allocation7 + $0x1c] sm:$0xf]
        %v565 = vunpack.c.l.b16 %v553
        %v566 = vunpack.c.l.b16 %v554
        %v567 = vunpack.c.l.b16 %v555
        %v568 = vunpack.c.l.b16 %v556
        %v569 = vpack.c.b16 %v566, %v565
        %v570 = vpack.c.b16 %v568, %v567
        %vm573 = vcmask 261120
        %v575 = vsel %vm573, %v552, 0
        %577 = vmatprep.subr.bf16.mxu0 0
        %578 = vmatpush1.bf16.msra.mxu0 %v569
        %579 = vmatprep.subr.bf16.mxu0 0
        %580 = vmatpush1.bf16.msra.mxu0 %v570
        %581 = vmatprep.subr.bf16.mxu0 0
        %582 = vmatpush1.bf16.msra.mxu0 0
        %583 = vmatprep.subr.bf16.mxu0 0
        %584 = vmatpush1.bf16.msra.mxu0 0
        %585 = vmatprep.subr.bf16.mxu0 0
        %586 = vmatpush1.bf16.msra.mxu0 0
        %587 = vmatprep.subr.bf16.mxu0 0
        %588 = vmatpush1.bf16.msra.mxu0 0
        %589 = vmatprep.subr.bf16.mxu0 0
        %590 = vmatpush1.bf16.msra.mxu0 0
        %591 = vmatprep.subr.bf16.mxu0 0
        %592 = vmatpush1.bf16.msra.mxu0 0
        %593 = vmatprep.subr.bf16.mxu0 0
        %594 = vmatpush1.bf16.msra.mxu0 0
        %595 = vmatprep.subr.bf16.mxu0 0
        %596 = vmatpush1.bf16.msra.mxu0 0
        %597 = vmatprep.subr.bf16.mxu0 0
        %598 = vmatpush1.bf16.msra.mxu0 0
        %599 = vmatprep.subr.bf16.mxu0 0
        %600 = vmatpush1.bf16.msra.mxu0 0
        %601 = vmatprep.subr.bf16.mxu0 0
        %602 = vmatpush1.bf16.msra.mxu0 0
        %603 = vmatprep.subr.bf16.mxu0 0
        %604 = vmatpush1.bf16.msra.mxu0 0
        %605 = vmatprep.subr.bf16.mxu0 0
        %606 = vmatpush1.bf16.msra.mxu0 0
        %607 = vmatprep.subr.bf16.mxu0 0
        %608 = vmatpush1.bf16.msra.mxu0 0
        %609 = vmatprep.mubr.bf16.mxu0 0
        %610 = vmatmul.mubr.bf16.gmra.mrb[0].mxu0 %v575
        %v611 = vpop.f32.mrb[0].mxu0
        %v612 = vadd.f32 0.0, %v611
        %v613 = vpop.f32.mrb[0].mxu0
        %v614 = vpop.f32.mrb[0].mxu0
        %v615 = vpop.f32.mrb[0].mxu0
        %616 = vdwg.mxu0
        %v621 = vunpack.c.l.b16 %v557
        %v622 = vunpack.c.l.b16 %v558
        %v623 = vunpack.c.l.b16 %v559
        %v624 = vunpack.c.l.b16 %v560
        %v625 = vpack.c.b16 %v622, %v621
        %v626 = vpack.c.b16 %v624, %v623
        %629 = vmatprep.subr.bf16.mxu0 0
        %630 = vmatpush1.bf16.msra.mxu0 %v625
        %631 = vmatprep.subr.bf16.mxu0 0
        %632 = vmatpush1.bf16.msra.mxu0 %v626
        %633 = vmatprep.subr.bf16.mxu0 0
        %634 = vmatpush1.bf16.msra.mxu0 0
        %635 = vmatprep.subr.bf16.mxu0 0
        %636 = vmatpush1.bf16.msra.mxu0 0
        %637 = vmatprep.subr.bf16.mxu0 0
        %638 = vmatpush1.bf16.msra.mxu0 0
        %639 = vmatprep.subr.bf16.mxu0 0
        %640 = vmatpush1.bf16.msra.mxu0 0
        %641 = vmatprep.subr.bf16.mxu0 0
        %642 = vmatpush1.bf16.msra.mxu0 0
        %643 = vmatprep.subr.bf16.mxu0 0
        %644 = vmatpush1.bf16.msra.mxu0 0
        %645 = vmatprep.subr.bf16.mxu0 0
        %646 = vmatpush1.bf16.msra.mxu0 0
        %647 = vmatprep.subr.bf16.mxu0 0
        %648 = vmatpush1.bf16.msra.mxu0 0
        %649 = vmatprep.subr.bf16.mxu0 0
        %650 = vmatpush1.bf16.msra.mxu0 0
        %651 = vmatprep.subr.bf16.mxu0 0
        %652 = vmatpush1.bf16.msra.mxu0 0
        %653 = vmatprep.subr.bf16.mxu0 0
        %654 = vmatpush1.bf16.msra.mxu0 0
        %655 = vmatprep.subr.bf16.mxu0 0
        %656 = vmatpush1.bf16.msra.mxu0 0
        %657 = vmatprep.subr.bf16.mxu0 0
        %658 = vmatpush1.bf16.msra.mxu0 0
        %659 = vmatprep.subr.bf16.mxu0 0
        %660 = vmatpush1.bf16.msra.mxu0 0
        %661 = vmatprep.mubr.bf16.mxu0 0
        %662 = vmatmul.mubr.bf16.gmra.mrb[0].mxu0 %v575
        %v663 = vpop.f32.mrb[0].mxu0
        %v664 = vadd.f32 0.0, %v663
        %v665 = vpop.f32.mrb[0].mxu0
        %v666 = vpop.f32.mrb[0].mxu0
        %v667 = vpop.f32.mrb[0].mxu0
        %668 = vdwg.mxu0
        %v669 = vld [vmem:[#allocation9] sm:$0xf]
        %v670 = vld [vmem:[#allocation9 + $0x4] sm:$0xf]
        %v671 = vld [vmem:[#allocation9 + $0x8] sm:$0xf]
        %v672 = vld [vmem:[#allocation9 + $0xc] sm:$0xf]
        %v673 = vld [vmem:[#allocation9 + $0x10] sm:$0xf]
        %v674 = vld [vmem:[#allocation9 + $0x14] sm:$0xf]
        %v675 = vld [vmem:[#allocation9 + $0x18] sm:$0xf]
        %v676 = vld [vmem:[#allocation9 + $0x1c] sm:$0xf]
        %v681 = vunpack.c.l.b16 %v669
        %v682 = vunpack.c.l.b16 %v670
        %v683 = vunpack.c.l.b16 %v671
        %v684 = vunpack.c.l.b16 %v672
        %v685 = vpack.c.b16 %v682, %v681
        %v686 = vpack.c.b16 %v684, %v683
        %689 = vmatprep.subr.bf16.mxu0 0
        %690 = vmatpush1.bf16.msra.mxu0 %v685
        %691 = vmatprep.subr.bf16.mxu0 0
        %692 = vmatpush1.bf16.msra.mxu0 %v686
        %693 = vmatprep.subr.bf16.mxu0 0
        %694 = vmatpush1.bf16.msra.mxu0 0
        %695 = vmatprep.subr.bf16.mxu0 0
        %696 = vmatpush1.bf16.msra.mxu0 0
        %697 = vmatprep.subr.bf16.mxu0 0
        %698 = vmatpush1.bf16.msra.mxu0 0
        %699 = vmatprep.subr.bf16.mxu0 0
        %700 = vmatpush1.bf16.msra.mxu0 0
        %701 = vmatprep.subr.bf16.mxu0 0
        %702 = vmatpush1.bf16.msra.mxu0 0
        %703 = vmatprep.subr.bf16.mxu0 0
        %704 = vmatpush1.bf16.msra.mxu0 0
        %705 = vmatprep.subr.bf16.mxu0 0
        %706 = vmatpush1.bf16.msra.mxu0 0
        %707 = vmatprep.subr.bf16.mxu0 0
        %708 = vmatpush1.bf16.msra.mxu0 0
        %709 = vmatprep.subr.bf16.mxu0 0
        %710 = vmatpush1.bf16.msra.mxu0 0
        %711 = vmatprep.subr.bf16.mxu0 0
        %712 = vmatpush1.bf16.msra.mxu0 0
        %713 = vmatprep.subr.bf16.mxu0 0
        %714 = vmatpush1.bf16.msra.mxu0 0
        %715 = vmatprep.subr.bf16.mxu0 0
        %716 = vmatpush1.bf16.msra.mxu0 0
        %717 = vmatprep.subr.bf16.mxu0 0
        %718 = vmatpush1.bf16.msra.mxu0 0
        %719 = vmatprep.subr.bf16.mxu0 0
        %720 = vmatpush1.bf16.msra.mxu0 0
        %721 = vmatprep.mubr.bf16.mxu0 0
        %722 = vmatmul.mubr.bf16.gmra.mrb[0].mxu0 %v575
        %v723 = vpop.f32.mrb[0].mxu0
        %v724 = vadd.f32 0.0, %v723
        %v725 = vpop.f32.mrb[0].mxu0
        %v726 = vpop.f32.mrb[0].mxu0
        %v727 = vpop.f32.mrb[0].mxu0
        %728 = vdwg.mxu0
        %v733 = vunpack.c.l.b16 %v673
        %v734 = vunpack.c.l.b16 %v674
        %v735 = vunpack.c.l.b16 %v675
        %v736 = vunpack.c.l.b16 %v676
        %v737 = vpack.c.b16 %v734, %v733
        %v738 = vpack.c.b16 %v736, %v735
        %741 = vmatprep.subr.bf16.mxu0 0
        %742 = vmatpush1.bf16.msra.mxu0 %v737
        %743 = vmatprep.subr.bf16.mxu0 0
        %744 = vmatpush1.bf16.msra.mxu0 %v738
        %745 = vmatprep.subr.bf16.mxu0 0
        %746 = vmatpush1.bf16.msra.mxu0 0
        %747 = vmatprep.subr.bf16.mxu0 0
        %748 = vmatpush1.bf16.msra.mxu0 0
        %749 = vmatprep.subr.bf16.mxu0 0
        %750 = vmatpush1.bf16.msra.mxu0 0
        %751 = vmatprep.subr.bf16.mxu0 0
        %752 = vmatpush1.bf16.msra.mxu0 0
        %753 = vmatprep.subr.bf16.mxu0 0
        %754 = vmatpush1.bf16.msra.mxu0 0
        %755 = vmatprep.subr.bf16.mxu0 0
        %756 = vmatpush1.bf16.msra.mxu0 0
        %757 = vmatprep.subr.bf16.mxu0 0
        %758 = vmatpush1.bf16.msra.mxu0 0
        %759 = vmatprep.subr.bf16.mxu0 0
        %760 = vmatpush1.bf16.msra.mxu0 0
        %761 = vmatprep.subr.bf16.mxu0 0
        %762 = vmatpush1.bf16.msra.mxu0 0
        %763 = vmatprep.subr.bf16.mxu0 0
        %764 = vmatpush1.bf16.msra.mxu0 0
        %765 = vmatprep.subr.bf16.mxu0 0
        %766 = vmatpush1.bf16.msra.mxu0 0
        %767 = vmatprep.subr.bf16.mxu0 0
        %768 = vmatpush1.bf16.msra.mxu0 0
        %769 = vmatprep.subr.bf16.mxu0 0
        %770 = vmatpush1.bf16.msra.mxu0 0
        %771 = vmatprep.subr.bf16.mxu0 0
        %772 = vmatpush1.bf16.msra.mxu0 0
        %773 = vmatprep.mubr.bf16.mxu0 0
        %774 = vmatmul.mubr.bf16.gmra.mrb[0].mxu0 %v575
        %v775 = vpop.f32.mrb[0].mxu0
        %v776 = vadd.f32 0.0, %v775
        %v777 = vpop.f32.mrb[0].mxu0
        %v778 = vpop.f32.mrb[0].mxu0
        %v779 = vpop.f32.mrb[0].mxu0
        %780 = vdwg.mxu0
        %v781 = vld [vmem:[#allocation10] sm:$0xf]
        %v782 = vld [vmem:[#allocation10 + $0x4] sm:$0xf]
        %v783 = vld [vmem:[#allocation10 + $0x8] sm:$0xf]
        %v784 = vld [vmem:[#allocation10 + $0xc] sm:$0xf]
        %v785 = vld [vmem:[#allocation10 + $0x10] sm:$0xf]
        %v786 = vld [vmem:[#allocation10 + $0x14] sm:$0xf]
        %v787 = vld [vmem:[#allocation10 + $0x18] sm:$0xf]
        %v788 = vld [vmem:[#allocation10 + $0x1c] sm:$0xf]
        %v793 = vunpack.c.l.b16 %v781
        %v794 = vunpack.c.l.b16 %v782
        %v795 = vunpack.c.l.b16 %v783
        %v796 = vunpack.c.l.b16 %v784
        %v797 = vpack.c.b16 %v794, %v793
        %v798 = vpack.c.b16 %v796, %v795
        %801 = vmatprep.subr.bf16.mxu0 0
        %802 = vmatpush1.bf16.msra.mxu0 %v797
        %803 = vmatprep.subr.bf16.mxu0 0
        %804 = vmatpush1.bf16.msra.mxu0 %v798
        %805 = vmatprep.subr.bf16.mxu0 0
        %806 = vmatpush1.bf16.msra.mxu0 0
        %807 = vmatprep.subr.bf16.mxu0 0
        %808 = vmatpush1.bf16.msra.mxu0 0
        %809 = vmatprep.subr.bf16.mxu0 0
        %810 = vmatpush1.bf16.msra.mxu0 0
        %811 = vmatprep.subr.bf16.mxu0 0
        %812 = vmatpush1.bf16.msra.mxu0 0
        %813 = vmatprep.subr.bf16.mxu0 0
        %814 = vmatpush1.bf16.msra.mxu0 0
        %815 = vmatprep.subr.bf16.mxu0 0
        %816 = vmatpush1.bf16.msra.mxu0 0
        %817 = vmatprep.subr.bf16.mxu0 0
        %818 = vmatpush1.bf16.msra.mxu0 0
        %819 = vmatprep.subr.bf16.mxu0 0
        %820 = vmatpush1.bf16.msra.mxu0 0
        %821 = vmatprep.subr.bf16.mxu0 0
        %822 = vmatpush1.bf16.msra.mxu0 0
        %823 = vmatprep.subr.bf16.mxu0 0
        %824 = vmatpush1.bf16.msra.mxu0 0
        %825 = vmatprep.subr.bf16.mxu0 0
        %826 = vmatpush1.bf16.msra.mxu0 0
        %827 = vmatprep.subr.bf16.mxu0 0
        %828 = vmatpush1.bf16.msra.mxu0 0
        %829 = vmatprep.subr.bf16.mxu0 0
        %830 = vmatpush1.bf16.msra.mxu0 0
        %831 = vmatprep.subr.bf16.mxu0 0
        %832 = vmatpush1.bf16.msra.mxu0 0
        %833 = vmatprep.mubr.bf16.mxu0 0
        %834 = vmatmul.mubr.bf16.gmra.mrb[0].mxu0 %v575
        %v835 = vpop.f32.mrb[0].mxu0
        %v836 = vadd.f32 0.0, %v835
        %v837 = vpop.f32.mrb[0].mxu0
        %v838 = vpop.f32.mrb[0].mxu0
        %v839 = vpop.f32.mrb[0].mxu0
        %840 = vdwg.mxu0
        %v845 = vunpack.c.l.b16 %v785
        %v846 = vunpack.c.l.b16 %v786
        %v847 = vunpack.c.l.b16 %v787
        %v848 = vunpack.c.l.b16 %v788
        %v849 = vpack.c.b16 %v846, %v845
        %v850 = vpack.c.b16 %v848, %v847
        %853 = vmatprep.subr.bf16.mxu0 0
        %854 = vmatpush1.bf16.msra.mxu0 %v849
        %855 = vmatprep.subr.bf16.mxu0 0
        %856 = vmatpush1.bf16.msra.mxu0 %v850
        %857 = vmatprep.subr.bf16.mxu0 0
        %858 = vmatpush1.bf16.msra.mxu0 0
        %859 = vmatprep.subr.bf16.mxu0 0
        %860 = vmatpush1.bf16.msra.mxu0 0
        %861 = vmatprep.subr.bf16.mxu0 0
        %862 = vmatpush1.bf16.msra.mxu0 0
        %863 = vmatprep.subr.bf16.mxu0 0
        %864 = vmatpush1.bf16.msra.mxu0 0
        %865 = vmatprep.subr.bf16.mxu0 0
        %866 = vmatpush1.bf16.msra.mxu0 0
        %867 = vmatprep.subr.bf16.mxu0 0
        %868 = vmatpush1.bf16.msra.mxu0 0
        %869 = vmatprep.subr.bf16.mxu0 0
        %870 = vmatpush1.bf16.msra.mxu0 0
        %871 = vmatprep.subr.bf16.mxu0 0
        %872 = vmatpush1.bf16.msra.mxu0 0
        %873 = vmatprep.subr.bf16.mxu0 0
        %874 = vmatpush1.bf16.msra.mxu0 0
        %875 = vmatprep.subr.bf16.mxu0 0
        %876 = vmatpush1.bf16.msra.mxu0 0
        %877 = vmatprep.subr.bf16.mxu0 0
        %878 = vmatpush1.bf16.msra.mxu0 0
        %879 = vmatprep.subr.bf16.mxu0 0
        %880 = vmatpush1.bf16.msra.mxu0 0
        %881 = vmatprep.subr.bf16.mxu0 0
        %882 = vmatpush1.bf16.msra.mxu0 0
        %883 = vmatprep.subr.bf16.mxu0 0
        %884 = vmatpush1.bf16.msra.mxu0 0
        %885 = vmatprep.mubr.bf16.mxu0 0
        %886 = vmatmul.mubr.bf16.gmra.mrb[0].mxu0 %v575
        %v887 = vpop.f32.mrb[0].mxu0
        %v888 = vadd.f32 0.0, %v887
        %v889 = vpop.f32.mrb[0].mxu0
        %v890 = vpop.f32.mrb[0].mxu0
        %v891 = vpop.f32.mrb[0].mxu0
        %892 = vdwg.mxu0
        %v893 = vmul.f32 %v612, 0.25
        %v894 = vmul.f32 %v664, 0.25
        %v895 = vpack.c.bf16 %v893, %v893
        %v896 = vpack.c.bf16 %v894, %v894
        %v897 = vpack.c.bf16 %v724, %v724
        %v898 = vpack.c.bf16 %v776, %v776
        %v899 = vpack.c.bf16 %v836, %v836
        %v900 = vpack.c.bf16 %v888, %v888
        %vm901 = vcmask 130048
        %v903 = vsel %vm901, %v895, 0
        %v906 = vsel %vm901, %v897, 0
        %908 = vmatprep.subr.bf16.mxu0 0
        %909 = vmatpush1.bf16.xpose.msra.mxu0 %v906
        %910 = vmatprep.subr.bf16.mxu0 0
        %911 = vmatpush1.bf16.xpose.msra.mxu0 0
        %912 = vmatprep.subr.bf16.mxu0 0
        %913 = vmatpush1.bf16.xpose.msra.mxu0 0
        %914 = vmatprep.subr.bf16.mxu0 0
        %915 = vmatpush1.bf16.xpose.msra.mxu0 0
        %916 = vmatprep.subr.bf16.mxu0 0
        %917 = vmatpush1.bf16.xpose.msra.mxu0 0
        %918 = vmatprep.subr.bf16.mxu0 0
        %919 = vmatpush1.bf16.xpose.msra.mxu0 0
        %920 = vmatprep.subr.bf16.mxu0 0
        %921 = vmatpush1.bf16.xpose.msra.mxu0 0
        %922 = vmatprep.subr.bf16.mxu0 0
        %923 = vmatpush1.bf16.xpose.msra.mxu0 0
        %924 = vmatprep.subr.bf16.mxu0 0
        %925 = vmatpush1.bf16.xpose.msra.mxu0 0
        %926 = vmatprep.subr.bf16.mxu0 0
        %927 = vmatpush1.bf16.xpose.msra.mxu0 0
        %928 = vmatprep.subr.bf16.mxu0 0
        %929 = vmatpush1.bf16.xpose.msra.mxu0 0
        %930 = vmatprep.subr.bf16.mxu0 0
        %931 = vmatpush1.bf16.xpose.msra.mxu0 0
        %932 = vmatprep.subr.bf16.mxu0 0
        %933 = vmatpush1.bf16.xpose.msra.mxu0 0
        %934 = vmatprep.subr.bf16.mxu0 0
        %935 = vmatpush1.bf16.xpose.msra.mxu0 0
        %936 = vmatprep.subr.bf16.mxu0 0
        %937 = vmatpush1.bf16.xpose.msra.mxu0 0
        %938 = vmatprep.subr.bf16.mxu0 0
        %939 = vmatpush1.bf16.xpose.msra.mxu0 0
        %940 = vmatprep.mubr.bf16.mxu0 0
        %941 = vmatmul.mubr.bf16.gmra.mrb[0].mxu0 %v903
        %v942 = vpop.f32.mrb[0].mxu0
        %v943 = vadd.f32 %v551, %v942
        %v944 = vpop.f32.mrb[0].mxu0
        %v945 = vpop.f32.mrb[0].mxu0
        %v946 = vpop.f32.mrb[0].mxu0
        %947 = vdwg.mxu0
        %v949 = vsel %vm901, %v896, 0
        %v952 = vsel %vm901, %v898, 0
        %954 = vmatprep.subr.bf16.mxu0 0
        %955 = vmatpush1.bf16.xpose.msra.mxu0 %v952
        %956 = vmatprep.subr.bf16.mxu0 0
        %957 = vmatpush1.bf16.xpose.msra.mxu0 0
        %958 = vmatprep.subr.bf16.mxu0 0
        %959 = vmatpush1.bf16.xpose.msra.mxu0 0
        %960 = vmatprep.subr.bf16.mxu0 0
        %961 = vmatpush1.bf16.xpose.msra.mxu0 0
        %962 = vmatprep.subr.bf16.mxu0 0
        %963 = vmatpush1.bf16.xpose.msra.mxu0 0
        %964 = vmatprep.subr.bf16.mxu0 0
        %965 = vmatpush1.bf16.xpose.msra.mxu0 0
        %966 = vmatprep.subr.bf16.mxu0 0
        %967 = vmatpush1.bf16.xpose.msra.mxu0 0
        %968 = vmatprep.subr.bf16.mxu0 0
        %969 = vmatpush1.bf16.xpose.msra.mxu0 0
        %970 = vmatprep.subr.bf16.mxu0 0
        %971 = vmatpush1.bf16.xpose.msra.mxu0 0
        %972 = vmatprep.subr.bf16.mxu0 0
        %973 = vmatpush1.bf16.xpose.msra.mxu0 0
        %974 = vmatprep.subr.bf16.mxu0 0
        %975 = vmatpush1.bf16.xpose.msra.mxu0 0
        %976 = vmatprep.subr.bf16.mxu0 0
        %977 = vmatpush1.bf16.xpose.msra.mxu0 0
        %978 = vmatprep.subr.bf16.mxu0 0
        %979 = vmatpush1.bf16.xpose.msra.mxu0 0
        %980 = vmatprep.subr.bf16.mxu0 0
        %981 = vmatpush1.bf16.xpose.msra.mxu0 0
        %982 = vmatprep.subr.bf16.mxu0 0
        %983 = vmatpush1.bf16.xpose.msra.mxu0 0
        %984 = vmatprep.subr.bf16.mxu0 0
        %985 = vmatpush1.bf16.xpose.msra.mxu0 0
        %986 = vmatprep.mubr.bf16.mxu0 0
        %987 = vmatmul.mubr.bf16.gmra.mrb[0].mxu0 %v949
        %v988 = vpop.f32.mrb[0].mxu0
        %v989 = vadd.f32 %v551, %v988
        %v990 = vpop.f32.mrb[0].mxu0
        %v991 = vpop.f32.mrb[0].mxu0
        %v992 = vpop.f32.mrb[0].mxu0
        %993 = vdwg.mxu0
        %vm994 = vcmask 64512
        %v995 = vsel %vm994, %v943, -inf
        %996 = vmax.xlane.f32.xlu0 %v995
        %v997 = vpop.xlane.xlu0 %996
        %v998 = vsel %vm994, %v989, -inf
        %999 = vmax.xlane.f32.xlu0 %v998
        %v1000 = vpop.xlane.xlu0 %999
        %v1001 = vsub.f32 %v943, %v997
        %v1002 = vsub.f32 %v989, %v1000
        %v1003 = vmul.f32 %v1001, 1.442695
        %v1004 = vpow.pop %v1003
        %v1005 = vmul.f32 %v1002, 1.442695
        %v1006 = vpow.pop %v1005
        %v1007 = vsel %vm994, %v1004, 0.0
        %1008 = vadd.xlane.f32.xlu0 %v1007
        %v1009 = vpop.xlane.xlu0 %1008
        %v1010 = vsel %vm994, %v1006, 0.0
        %1011 = vadd.xlane.f32.xlu0 %v1010
        %v1012 = vpop.xlane.xlu0 %1011
        %v1013 = vrcp.pop %v1009
        %v1014 = vrcp.pop %v1012
        %v1015 = vmul.f32 %v1004, %v1013
        %v1016 = vmul.f32 %v1006, %v1014
        %v1017 = vpack.c.bf16 %v1015, %v1015
        %v1018 = vpack.c.bf16 %v1016, %v1016
        %v1020 = vsel %vm994, %v1017, 0
        %vm1022 = vcmask 1043456
        %v1024 = vsel %vm1022, %v899, 0
        %1026 = vmatprep.subr.bf16.mxu0 0
        %1027 = vmatpush1.bf16.msra.mxu0 %v1024
        %1028 = vmatprep.subr.bf16.mxu0 0
        %1029 = vmatpush1.bf16.msra.mxu0 0
        %1030 = vmatprep.subr.bf16.mxu0 0
        %1031 = vmatpush1.bf16.msra.mxu0 0
        %1032 = vmatprep.subr.bf16.mxu0 0
        %1033 = vmatpush1.bf16.msra.mxu0 0
        %1034 = vmatprep.subr.bf16.mxu0 0
        %1035 = vmatpush1.bf16.msra.mxu0 0
        %1036 = vmatprep.subr.bf16.mxu0 0
        %1037 = vmatpush1.bf16.msra.mxu0 0
        %1038 = vmatprep.subr.bf16.mxu0 0
        %1039 = vmatpush1.bf16.msra.mxu0 0
        %1040 = vmatprep.subr.bf16.mxu0 0
        %1041 = vmatpush1.bf16.msra.mxu0 0
        %1042 = vmatprep.subr.bf16.mxu0 0
        %1043 = vmatpush1.bf16.msra.mxu0 0
        %1044 = vmatprep.subr.bf16.mxu0 0
        %1045 = vmatpush1.bf16.msra.mxu0 0
        %1046 = vmatprep.subr.bf16.mxu0 0
        %1047 = vmatpush1.bf16.msra.mxu0 0
        %1048 = vmatprep.subr.bf16.mxu0 0
        %1049 = vmatpush1.bf16.msra.mxu0 0
        %1050 = vmatprep.subr.bf16.mxu0 0
        %1051 = vmatpush1.bf16.msra.mxu0 0
        %1052 = vmatprep.subr.bf16.mxu0 0
        %1053 = vmatpush1.bf16.msra.mxu0 0
        %1054 = vmatprep.subr.bf16.mxu0 0
        %1055 = vmatpush1.bf16.msra.mxu0 0
        %1056 = vmatprep.subr.bf16.mxu0 0
        %1057 = vmatpush1.bf16.msra.mxu0 0
        %1058 = vmatprep.mubr.bf16.mxu0 0
        %1059 = vmatmul.mubr.bf16.gmra.mrb[0].mxu0 %v1020
        %v1060 = vpop.f32.mrb[0].mxu0
        %v1061 = vadd.f32 0.0, %v1060
        %v1062 = vpop.f32.mrb[0].mxu0
        %v1063 = vpop.f32.mrb[0].mxu0
        %v1064 = vpop.f32.mrb[0].mxu0
        %1065 = vdwg.mxu0
        %v1067 = vsel %vm994, %v1018, 0
        %v1070 = vsel %vm1022, %v900, 0
        %1072 = vmatprep.subr.bf16.mxu0 0
        %1073 = vmatpush1.bf16.msra.mxu0 %v1070
        %1074 = vmatprep.subr.bf16.mxu0 0
        %1075 = vmatpush1.bf16.msra.mxu0 0
        %1076 = vmatprep.subr.bf16.mxu0 0
        %1077 = vmatpush1.bf16.msra.mxu0 0
        %1078 = vmatprep.subr.bf16.mxu0 0
        %1079 = vmatpush1.bf16.msra.mxu0 0
        %1080 = vmatprep.subr.bf16.mxu0 0
        %1081 = vmatpush1.bf16.msra.mxu0 0
        %1082 = vmatprep.subr.bf16.mxu0 0
        %1083 = vmatpush1.bf16.msra.mxu0 0
        %1084 = vmatprep.subr.bf16.mxu0 0
        %1085 = vmatpush1.bf16.msra.mxu0 0
        %1086 = vmatprep.subr.bf16.mxu0 0
        %1087 = vmatpush1.bf16.msra.mxu0 0
        %1088 = vmatprep.subr.bf16.mxu0 0
        %1089 = vmatpush1.bf16.msra.mxu0 0
        %1090 = vmatprep.subr.bf16.mxu0 0
        %1091 = vmatpush1.bf16.msra.mxu0 0
        %1092 = vmatprep.subr.bf16.mxu0 0
        %1093 = vmatpush1.bf16.msra.mxu0 0
        %1094 = vmatprep.subr.bf16.mxu0 0
        %1095 = vmatpush1.bf16.msra.mxu0 0
        %1096 = vmatprep.subr.bf16.mxu0 0
        %1097 = vmatpush1.bf16.msra.mxu0 0
        %1098 = vmatprep.subr.bf16.mxu0 0
        %1099 = vmatpush1.bf16.msra.mxu0 0
        %1100 = vmatprep.subr.bf16.mxu0 0
        %1101 = vmatpush1.bf16.msra.mxu0 0
        %1102 = vmatprep.subr.bf16.mxu0 0
        %1103 = vmatpush1.bf16.msra.mxu0 0
        %1104 = vmatprep.mubr.bf16.mxu0 0
        %1105 = vmatmul.mubr.bf16.gmra.mrb[0].mxu0 %v1067
        %v1106 = vpop.f32.mrb[0].mxu0
        %v1107 = vadd.f32 0.0, %v1106
        %v1108 = vpop.f32.mrb[0].mxu0
        %v1109 = vpop.f32.mrb[0].mxu0
        %v1110 = vpop.f32.mrb[0].mxu0
        %1111 = vdwg.mxu0
        %v1112 = vpack.c.bf16 %v1061, %v1061
        %v1113 = vpack.c.bf16 %v1107, %v1107
        %v1114 = vld [vmem:[#allocation12] sm:$0xf]
        %v1115 = vld [vmem:[#allocation12 + $0x4] sm:$0xf]
        %v1116 = vld [vmem:[#allocation12 + $0x8] sm:$0xf]
        %v1117 = vld [vmem:[#allocation12 + $0xc] sm:$0xf]
        %v1120 = vunpack.c.l.b16 %v1114
        %v1121 = vunpack.c.l.b16 %v1115
        %v1122 = vpack.c.b16 %v1121, %v1120
        %v1125 = vsel %vm901, %v1112, 0
        %1127 = vmatprep.subr.bf16.mxu0 0
        %1128 = vmatpush1.bf16.msra.mxu0 %v1122
        %1129 = vmatprep.subr.bf16.mxu0 0
        %1130 = vmatpush1.bf16.msra.mxu0 0
        %1131 = vmatprep.subr.bf16.mxu0 0
        %1132 = vmatpush1.bf16.msra.mxu0 0
        %1133 = vmatprep.subr.bf16.mxu0 0
        %1134 = vmatpush1.bf16.msra.mxu0 0
        %1135 = vmatprep.subr.bf16.mxu0 0
        %1136 = vmatpush1.bf16.msra.mxu0 0
        %1137 = vmatprep.subr.bf16.mxu0 0
        %1138 = vmatpush1.bf16.msra.mxu0 0
        %1139 = vmatprep.subr.bf16.mxu0 0
        %1140 = vmatpush1.bf16.msra.mxu0 0
        %1141 = vmatprep.subr.bf16.mxu0 0
        %1142 = vmatpush1.bf16.msra.mxu0 0
        %1143 = vmatprep.subr.bf16.mxu0 0
        %1144 = vmatpush1.bf16.msra.mxu0 0
        %1145 = vmatprep.subr.bf16.mxu0 0
        %1146 = vmatpush1.bf16.msra.mxu0 0
        %1147 = vmatprep.subr.bf16.mxu0 0
        %1148 = vmatpush1.bf16.msra.mxu0 0
        %1149 = vmatprep.subr.bf16.mxu0 0
        %1150 = vmatpush1.bf16.msra.mxu0 0
        %1151 = vmatprep.subr.bf16.mxu0 0
        %1152 = vmatpush1.bf16.msra.mxu0 0
        %1153 = vmatprep.subr.bf16.mxu0 0
        %1154 = vmatpush1.bf16.msra.mxu0 0
        %1155 = vmatprep.subr.bf16.mxu0 0
        %1156 = vmatpush1.bf16.msra.mxu0 0
        %1157 = vmatprep.subr.bf16.mxu0 0
        %1158 = vmatpush1.bf16.msra.mxu0 0
        %1159 = vmatprep.mubr.bf16.mxu0 0
        %1160 = vmatmul.mubr.bf16.gmra.mrb[0].mxu0 %v1125
        %v1161 = vpop.f32.mrb[0].mxu0
        %v1162 = vadd.f32 0.0, %v1161
        %v1163 = vpop.f32.mrb[0].mxu0
        %v1164 = vpop.f32.mrb[0].mxu0
        %v1165 = vpop.f32.mrb[0].mxu0
        %1166 = vdwg.mxu0
        %v1169 = vunpack.c.l.b16 %v1116
        %v1170 = vunpack.c.l.b16 %v1117
        %v1171 = vpack.c.b16 %v1170, %v1169
        %v1174 = vsel %vm901, %v1113, 0
        %1176 = vmatprep.subr.bf16.mxu0 0
        %1177 = vmatpush1.bf16.msra.mxu0 %v1171
        %1178 = vmatprep.subr.bf16.mxu0 0
        %1179 = vmatpush1.bf16.msra.mxu0 0
        %1180 = vmatprep.subr.bf16.mxu0 0
        %1181 = vmatpush1.bf16.msra.mxu0 0
        %1182 = vmatprep.subr.bf16.mxu0 0
        %1183 = vmatpush1.bf16.msra.mxu0 0
        %1184 = vmatprep.subr.bf16.mxu0 0
        %1185 = vmatpush1.bf16.msra.mxu0 0
        %1186 = vmatprep.subr.bf16.mxu0 0
        %1187 = vmatpush1.bf16.msra.mxu0 0
        %1188 = vmatprep.subr.bf16.mxu0 0
        %1189 = vmatpush1.bf16.msra.mxu0 0
        %1190 = vmatprep.subr.bf16.mxu0 0
        %1191 = vmatpush1.bf16.msra.mxu0 0
        %1192 = vmatprep.subr.bf16.mxu0 0
        %1193 = vmatpush1.bf16.msra.mxu0 0
        %1194 = vmatprep.subr.bf16.mxu0 0
        %1195 = vmatpush1.bf16.msra.mxu0 0
        %1196 = vmatprep.subr.bf16.mxu0 0
        %1197 = vmatpush1.bf16.msra.mxu0 0
        %1198 = vmatprep.subr.bf16.mxu0 0
        %1199 = vmatpush1.bf16.msra.mxu0 0
        %1200 = vmatprep.subr.bf16.mxu0 0
        %1201 = vmatpush1.bf16.msra.mxu0 0
        %1202 = vmatprep.subr.bf16.mxu0 0
        %1203 = vmatpush1.bf16.msra.mxu0 0
        %1204 = vmatprep.subr.bf16.mxu0 0
        %1205 = vmatpush1.bf16.msra.mxu0 0
        %1206 = vmatprep.subr.bf16.mxu0 0
        %1207 = vmatpush1.bf16.msra.mxu0 0
        %1208 = vmatprep.mubr.bf16.mxu0 0
        %1209 = vmatmul.mubr.bf16.gmra.mrb[0].mxu0 %v1174
        %v1210 = vpop.f32.mrb[0].mxu0
        %v1211 = vadd.f32 0.0, %v1210
        %v1212 = vpop.f32.mrb[0].mxu0
        %v1213 = vpop.f32.mrb[0].mxu0
        %v1214 = vpop.f32.mrb[0].mxu0
        %1215 = vdwg.mxu0
        %v1216 = vsel %vm573, %v1162, 0.0
        %v1217 = vsel %vm573, %v1211, 0.0
        %v1218 = vadd.f32 %v1216, %v1217
        %v1219 = vld [vmem:[#allocation13] sm:$0x1]
        %v1220 = vld [vmem:[#allocation15] sm:$0x1]
        %v1221 = vadd.f32 %v545, %v1218
        %v1222 = vsel %vm573, %v1221, 0.0
        %1223 = vadd.xlane.f32.xlu0 %v1222
        %v1224 = vpop.xlane.xlu0 %1223
        %v1225 = vrcp.pop 32.0
        %v1226 = vmul.f32 %v1224, %v1225
        %v1227 = vsub.f32 %v1221, %v1226
        %v1228 = vmul.f32 %v1227, %v1227
        %v1229 = vsel %vm573, %v1228, 0.0
        %1230 = vadd.xlane.f32.xlu0 %v1229
        %v1231 = vpop.xlane.xlu0 %1230
        %v1232 = vmul.f32 %v1231, %v1225
        %v1233 = vadd.f32 %v1232, 1e-05
        %v1234 = vrsqrt.pop %v1233
        %v1235 = vmul.f32 %v1227, %v1234
        %v1237 = vlaneseq
        %v1238 = vshrl.u32 %v1237, 7
        %v1239 = vsub.s32 0, %v1238
        %v1240 = vrot.slane %v1219, %v1239
        %v1242 = vmul.f32 %v1235, %v1240
        %v1244 = vlaneseq
        %v1245 = vshrl.u32 %v1244, 7
        %v1246 = vsub.s32 0, %v1245
        %v1247 = vrot.slane %v1220, %v1246
        %v1249 = vadd.f32 %v1242, %v1247
        %v1250 = vpack.c.bf16 %v1249, %v1249
        %v1251 = vld [vmem:[#allocation16] sm:$0xf]
        %v1252 = vld [vmem:[#allocation16 + $0x4] sm:$0xf]
        %v1253 = vld [vmem:[#allocation16 + $0x8] sm:$0xf]
        %v1254 = vld [vmem:[#allocation16 + $0xc] sm:$0xf]
        %v1255 = vld [vmem:[#allocation18] sm:$0x1]
        %v1257 = vlaneseq
        %v1258 = vshrl.u32 %v1257, 7
        %v1259 = vsub.s32 0, %v1258
        %v1260 = vrot.slane %v1255, %v1259
        %v1266 = vunpack.c.l.b16 %v1251
        %v1267 = vunpack.c.l.b16 %v1252
        %v1268 = vunpack.c.l.b16 %v1253
        %v1269 = vunpack.c.l.b16 %v1254
        %v1270 = vpack.c.b16 %v1267, %v1266
        %v1271 = vpack.c.b16 %v1269, %v1268
        %v1275 = vsel %vm573, %v1250, 0
        %1277 = vmatprep.subr.bf16.mxu0 0
        %1278 = vmatpush1.bf16.msra.mxu0 %v1270
        %1279 = vmatprep.subr.bf16.mxu0 0
        %1280 = vmatpush1.bf16.msra.mxu0 %v1271
        %1281 = vmatprep.subr.bf16.mxu0 0
        %1282 = vmatpush1.bf16.msra.mxu0 0
        %1283 = vmatprep.subr.bf16.mxu0 0
        %1284 = vmatpush1.bf16.msra.mxu0 0
        %1285 = vmatprep.subr.bf16.mxu0 0
        %1286 = vmatpush1.bf16.msra.mxu0 0
        %1287 = vmatprep.subr.bf16.mxu0 0
        %1288 = vmatpush1.bf16.msra.mxu0 0
        %1289 = vmatprep.subr.bf16.mxu0 0
        %1290 = vmatpush1.bf16.msra.mxu0 0
        %1291 = vmatprep.subr.bf16.mxu0 0
        %1292 = vmatpush1.bf16.msra.mxu0 0
        %1293 = vmatprep.subr.bf16.mxu0 0
        %1294 = vmatpush1.bf16.msra.mxu0 0
        %1295 = vmatprep.subr.bf16.mxu0 0
        %1296 = vmatpush1.bf16.msra.mxu0 0
        %1297 = vmatprep.subr.bf16.mxu0 0
        %1298 = vmatpush1.bf16.msra.mxu0 0
        %1299 = vmatprep.subr.bf16.mxu0 0
        %1300 = vmatpush1.bf16.msra.mxu0 0
        %1301 = vmatprep.subr.bf16.mxu0 0
        %1302 = vmatpush1.bf16.msra.mxu0 0
        %1303 = vmatprep.subr.bf16.mxu0 0
        %1304 = vmatpush1.bf16.msra.mxu0 0
        %1305 = vmatprep.subr.bf16.mxu0 0
        %1306 = vmatpush1.bf16.msra.mxu0 0
        %1307 = vmatprep.subr.bf16.mxu0 0
        %1308 = vmatpush1.bf16.msra.mxu0 0
        %1309 = vmatprep.mubr.bf16.mxu0 0
        %1310 = vmatmul.mubr.bf16.gmra.mrb[0].mxu0 %v1275
        %v1311 = vpop.f32.mrb[0].mxu0
        %v1312 = vadd.f32 %v1260, %v1311
        %v1313 = vpop.f32.mrb[0].mxu0
        %v1314 = vpop.f32.mrb[0].mxu0
        %v1315 = vpop.f32.mrb[0].mxu0
        %1316 = vdwg.mxu0
        %v1317 = vmax.f32 %v1312, 0.0
        %v1318 = vpack.c.bf16 %v1317, %v1317
        %v1319 = vld [vmem:[#allocation19] sm:$0xf]
        %v1320 = vld [vmem:[#allocation19 + $0x4] sm:$0xf]
        %v1321 = vld [vmem:[#allocation19 + $0x8] sm:$0xf]
        %v1322 = vld [vmem:[#allocation19 + $0xc] sm:$0xf]
        %v1323 = vld [vmem:[#allocation19 + $0x10] sm:$0xf]
        %v1324 = vld [vmem:[#allocation19 + $0x14] sm:$0xf]
        %v1325 = vld [vmem:[#allocation19 + $0x18] sm:$0xf]
        %v1326 = vld [vmem:[#allocation19 + $0x1c] sm:$0xf]
        %v1327 = vld [vmem:[#allocation21] sm:$0x1]
        %v1329 = vlaneseq
        %v1330 = vshrl.u32 %v1329, 7
        %v1331 = vsub.s32 0, %v1330
        %v1332 = vrot.slane %v1327, %v1331
        %v1342 = vunpack.c.l.b16 %v1319
        %v1343 = vunpack.c.l.b16 %v1320
        %v1344 = vunpack.c.l.b16 %v1321
        %v1345 = vunpack.c.l.b16 %v1322
        %v1346 = vunpack.c.l.b16 %v1323
        %v1347 = vunpack.c.l.b16 %v1324
        %v1348 = vunpack.c.l.b16 %v1325
        %v1349 = vunpack.c.l.b16 %v1326
        %v1350 = vpack.c.b16 %v1343, %v1342
        %v1351 = vpack.c.b16 %v1345, %v1344
        %v1352 = vpack.c.b16 %v1347, %v1346
        %v1353 = vpack.c.b16 %v1349, %v1348
        %vm1358 = vcmask 523264
        %v1360 = vsel %vm1358, %v1318, 0
        %1362 = vmatprep.subr.bf16.mxu0 0
        %1363 = vmatpush1.bf16.msra.mxu0 %v1350
        %1364 = vmatprep.subr.bf16.mxu0 0
        %1365 = vmatpush1.bf16.msra.mxu0 %v1351
        %1366 = vmatprep.subr.bf16.mxu0 0
        %1367 = vmatpush1.bf16.msra.mxu0 %v1352
        %1368 = vmatprep.subr.bf16.mxu0 0
        %1369 = vmatpush1.bf16.msra.mxu0 %v1353
        %1370 = vmatprep.subr.bf16.mxu0 0
        %1371 = vmatpush1.bf16.msra.mxu0 0
        %1372 = vmatprep.subr.bf16.mxu0 0
        %1373 = vmatpush1.bf16.msra.mxu0 0
        %1374 = vmatprep.subr.bf16.mxu0 0
        %1375 = vmatpush1.bf16.msra.mxu0 0
        %1376 = vmatprep.subr.bf16.mxu0 0
        %1377 = vmatpush1.bf16.msra.mxu0 0
        %1378 = vmatprep.subr.bf16.mxu0 0
        %1379 = vmatpush1.bf16.msra.mxu0 0
        %1380 = vmatprep.subr.bf16.mxu0 0
        %1381 = vmatpush1.bf16.msra.mxu0 0
        %1382 = vmatprep.subr.bf16.mxu0 0
        %1383 = vmatpush1.bf16.msra.mxu0 0
        %1384 = vmatprep.subr.bf16.mxu0 0
        %1385 = vmatpush1.bf16.msra.mxu0 0
        %1386 = vmatprep.subr.bf16.mxu0 0
        %1387 = vmatpush1.bf16.msra.mxu0 0
        %1388 = vmatprep.subr.bf16.mxu0 0
        %1389 = vmatpush1.bf16.msra.mxu0 0
        %1390 = vmatprep.subr.bf16.mxu0 0
        %1391 = vmatpush1.bf16.msra.mxu0 0
        %1392 = vmatprep.subr.bf16.mxu0 0
        %1393 = vmatpush1.bf16.msra.mxu0 0
        %1394 = vmatprep.mubr.bf16.mxu0 0
        %1395 = vmatmul.mubr.bf16.gmra.mrb[0].mxu0 %v1360
        %v1396 = vpop.f32.mrb[0].mxu0
        %v1397 = vadd.f32 %v1332, %v1396
        %v1398 = vpop.f32.mrb[0].mxu0
        %v1399 = vpop.f32.mrb[0].mxu0
        %v1400 = vpop.f32.mrb[0].mxu0
        %1401 = vdwg.mxu0
        %v1402 = vadd.f32 %v1249, %v1397
        %v1403 = vsel %vm573, %v1402, 0.0
        %1404 = vadd.xlane.f32.xlu0 %v1403
        %v1405 = vpop.xlane.xlu0 %1404
        %v1406 = vmul.f32 %v1405, %v1225
        %v1407 = vsub.f32 %v1402, %v1406
        %v1408 = vmul.f32 %v1407, %v1407
        %v1409 = vsel %vm573, %v1408, 0.0
        %1410 = vadd.xlane.f32.xlu0 %v1409
        %v1411 = vpop.xlane.xlu0 %1410
        %v1412 = vmul.f32 %v1411, %v1225
        %v1413 = vadd.f32 %v1412, 1e-05
        %v1414 = vrsqrt.pop %v1413
        %v1415 = vmul.f32 %v1407, %v1414
        %v1416 = vmul.f32 %v1415, %v1240
        %v1417 = vadd.f32 %v1416, %v1247
        %1418 = vst.msk [vmem:[%s543] sm:$0xff] %vm573, %v1417
        %s1419 = sand.u32 %s282, 1
        %s1420 = scalar_lea.sflag [#allocation6], %s1419
        %s1421 = sand.u32 %s282, 1
        %s1422 = smul.addr %s1421, 8
        %s1423 = scalar_lea.vmem [#allocation22], %s1422
        // Predicated region
        $region109: #{tpu_custom_call.1} parent=63 // pred_check
          %p1424 = pneg %p292
        $region110: #{tpu_custom_call.1} parent=63 // pred_check_branch
          %1426 = sbr.rel (%p1424) target = $region112
        $region111: #{tpu_custom_call.1} parent=63 // pred_region
          %s1428 = ssub.s32 128, 128
          %1429 = vsyncadd %s1420, %s1428
          %s1430 = smul.addr %s38, 128
          %s1431 = scalar_lea.hbm %s12, %s1430
          %s1433 = sshll.u32 %s1423, 4
          %s1434 = int_to_ptr.vmem [resolvable:$true] %s1433
          %1436 = dma.vmem_to_hbm [thread:$0]  %s1434, 128, %s1431, %s1420
        $region112: #{tpu_custom_call.1} parent=63 // pred_fallthru
          _
      $region64: #{tpu_custom_call.1} parent=5 // pred_fallthru
        _
      %p1437 = scmp.le.s32.totalorder 2, %s33
      // Predicated region
      $region113: #{tpu_custom_call.1} parent=5 // pred_check
        %p1438 = pneg %p1437
      $region114: #{tpu_custom_call.1} parent=5 // pred_check_branch
        %1440 = sbr.rel (%p1438) target = $region116
      $region115: #{tpu_custom_call.1} parent=5 // pred_region
        %s1441 = ssub.s32 %s33, 2
        // Predicated region
        $region117: #{tpu_custom_call.1} parent=115 // pred_check
          %p1442 = pneg %p298
        $region118: #{tpu_custom_call.1} parent=115 // pred_check_branch
          %1444 = sbr.rel (%p1442) target = $region120
        $region119: #{tpu_custom_call.1} parent=115 // pred_region
          %s1445 = sand.u32 %s283, 1
          %s1446 = scalar_lea.sflag [#allocation6], %s1445
          %s1447 = sand.u32 %s283, 1
          %s1448 = smul.addr %s1447, 8
          %s1449 = scalar_lea.vmem [#allocation22], %s1448
          %1450 = dma.done %s1446, 128
        $region120: #{tpu_custom_call.1} parent=115 // pred_fallthru
          _
      $region116: #{tpu_custom_call.1} parent=5 // pred_fallthru
        _
    $region6: #{tpu_custom_call.1} parent=1 // loop_footer
      %s37 = sadd.s32 1, %s33
    $region7: #{tpu_custom_call.1} parent=1 // loop_footer_branch
      %32 = sbr.rel target = $region3
    $region8: #{tpu_custom_call.1} parent=1 // loop_exit
      _
    %1451 = vsyncpa [#allocation5], 1
    %s1452 = scalar_lea.sflag [#allocation5], 1
    %1453 = vsyncpa %s1452, 1
    %1454 = vsyncpa [#allocation8], 1
    %1455 = vsyncpa [#allocation11], 1
    %1456 = vsyncpa [#allocation14], 1
    %1457 = vsyncpa [#allocation17], 1
    %1458 = vsyncpa [#allocation20], 1
    %1459 = vsyncpa [#allocation6], 1
    %s1460 = scalar_lea.sflag [#allocation6], 1
    %1461 = vsyncpa %s1460, 1

</llo_original>
